<compile_context>
chip_gen: v5e
topology: v5e:2x2
jax: 0.10.0
libtpu: 0.0.40
codegen_flags: <defaults>
</compile_context>

<pallas_src>
import functools
import math

import jax
import jax.numpy as jnp
from jax import lax
from jax.experimental import pallas as pl
from jax.experimental.pallas import tpu as pltpu


def _layernorm(x, w, b, eps=1e-5):
    mu = jnp.mean(x, axis=-1, keepdims=True)
    var = jnp.mean((x - mu) * (x - mu), axis=-1, keepdims=True)
    return (x - mu) * lax.rsqrt(var + eps) * w + b


def _gelu_exact(x):
    # PyTorch nn.GELU default = exact erf formulation.
    return 0.5 * x * (1.0 + lax.erf(x * (1.0 / math.sqrt(2.0))))


def _block_kernel(x_ref,
                  ln1w_ref, ln1b_ref, wqkv_ref, wproj_ref, bproj_ref,
                  ln2w_ref, ln2b_ref, w1_ref, b1_ref, w2_ref, b2_ref,
                  o_ref, acc_ref,
                  *, num_heads, dim, mlp_tile):
    head_dim = dim // num_heads
    n_tokens = x_ref.shape[0]

    x = x_ref[...].astype(jnp.float32)                          # (N, C) f32

    # ---- Attention branch: x + bproj + sum_h softmax(q_h k_h^T) v_h @ Wproj[h] ----
    xn = _layernorm(x, ln1w_ref[0], ln1b_ref[0])                # f32
    qkv = jnp.dot(xn.astype(jnp.bfloat16), wqkv_ref[...],       # bf16 x bf16 -> f32 acc
                  preferred_element_type=jnp.float32)           # (N, 3C); scale folded into Q
    qkv_bf = qkv.astype(jnp.bfloat16)

    for h in range(num_heads):
        q = qkv_bf[:, h * head_dim:(h + 1) * head_dim]                          # (N, hd)
        k = qkv_bf[:, dim + h * head_dim:dim + (h + 1) * head_dim]              # (N, hd)
        v = qkv_bf[:, 2 * dim + h * head_dim:2 * dim + (h + 1) * head_dim]      # (N, hd)

        # q @ k^T without materializing a transpose (contract last dim of both).
        s = lax.dot_general(q, k, (((1,), (1,)), ((), ())),
                            preferred_element_type=jnp.float32)                 # (N, N) f32
        s = s - jnp.max(s, axis=-1, keepdims=True)
        e = jnp.exp(s)
        p = e * pl.reciprocal(jnp.sum(e, axis=-1, keepdims=True), approx=True)  # f32 probs

        ctx = jnp.dot(p.astype(jnp.bfloat16), v,
                      preferred_element_type=jnp.float32)                       # (N, hd)
        contrib = jnp.dot(ctx.astype(jnp.bfloat16), wproj_ref[h],
                          preferred_element_type=jnp.float32)                   # (N, C)
        if h == 0:
            acc_ref[...] = contrib          # fused output projection, no concat
        else:
            acc_ref[...] += contrib

    # Residual 1 (kept in f32 in the scratch): x1 = x + attn_proj + bproj
    acc_ref[...] = x + acc_ref[...] + bproj_ref[0]

    # ---- MLP branch over token tiles: x1 + fc2(gelu(fc1(norm2(x1)))) ----
    num_tiles = n_tokens // mlp_tile
    for t in range(num_tiles):
        r = t * mlp_tile
        x1_t = acc_ref[pl.ds(r, mlp_tile), :]                                   # (tile, C) f32
        x1n = _layernorm(x1_t, ln2w_ref[0], ln2b_ref[0])
        h1 = jnp.dot(x1n.astype(jnp.bfloat16), w1_ref[...],
                     preferred_element_type=jnp.float32) + b1_ref[0]            # (tile, hidden)
        h1 = _gelu_exact(h1)
        mlp = jnp.dot(h1.astype(jnp.bfloat16), w2_ref[...],
                      preferred_element_type=jnp.float32) + b2_ref[0]           # (tile, C)
        o_ref[pl.ds(r, mlp_tile), :] = (x1_t + mlp).astype(o_ref.dtype)


def _pick_mlp_tile(n, target=256):
    # Largest row-tile <= target that divides N (prefer multiples of 8).
    # On v5e a 128-row target is marginally better; 256 is a good default for v6e/v7x.
    if n <= target:
        return n
    for t in range(target, 7, -8):
        if n % t == 0:
            return t
    return n


def _prepare_params(params, num_heads, dim):
    """Wrapper-side one-time prep: fold softmax scale into Q, head-major proj, bf16 weights."""
    hd = dim // num_heads
    scale = hd ** (-0.5)
    wqkv = params["wqkv"]
    wqkv = jnp.concatenate([wqkv[:, :dim] * scale, wqkv[:, dim:]], axis=1)
    return dict(
        ln1_w=params["ln1_w"].astype(jnp.float32),
        ln1_b=params["ln1_b"].astype(jnp.float32),
        wqkv=wqkv.astype(jnp.bfloat16),                                   # (C, 3C)
        wproj=params["wproj"].reshape(num_heads, hd, dim).astype(jnp.bfloat16),
        bproj=params["bproj"].astype(jnp.float32),
        ln2_w=params["ln2_w"].astype(jnp.float32),
        ln2_b=params["ln2_b"].astype(jnp.float32),
        w1=params["w1"].astype(jnp.bfloat16),
        b1=params["b1"].astype(jnp.float32),
        w2=params["w2"].astype(jnp.bfloat16),
        b2=params["b2"].astype(jnp.float32),
    )


def block_forward(x, params, *, num_heads):
    B, N, C = x.shape
    hidden = params["w1"].shape[1]
    hd = C // num_heads
    p = _prepare_params(params, num_heads, C)
    mlp_tile = _pick_mlp_tile(N)

    def full(shape):
        return pl.BlockSpec(shape, lambda b, _n=len(shape): (0,) * _n)

    kernel = functools.partial(_block_kernel, num_heads=num_heads, dim=C,
                               mlp_tile=mlp_tile)
    return pl.pallas_call(
        kernel,
        out_shape=jax.ShapeDtypeStruct((B, N, C), x.dtype),
        grid_spec=pltpu.PrefetchScalarGridSpec(
            num_scalar_prefetch=0,
            grid=(B,),
            in_specs=[
                pl.BlockSpec((None, N, C), lambda b: (b, 0, 0)),   # x (batch squeezed)
                full((1, C)), full((1, C)),                        # ln1 w, b   (f32)
                full((C, 3 * C)),                                  # Wqkv       (bf16, Q pre-scaled)
                full((num_heads, hd, C)), full((1, C)),            # Wproj head-major (bf16), bproj
                full((1, C)), full((1, C)),                        # ln2 w, b   (f32)
                full((C, hidden)), full((1, hidden)),              # fc1 (bf16 W, f32 b)
                full((hidden, C)), full((1, C)),                   # fc2 (bf16 W, f32 b)
            ],
            out_specs=pl.BlockSpec((None, N, C), lambda b: (b, 0, 0)),
            scratch_shapes=[pltpu.VMEM((N, C), jnp.float32)],      # attn accumulator / x1
        ),
        compiler_params=pltpu.CompilerParams(
            dimension_semantics=("parallel",),
            vmem_limit_bytes=64 * 1024 * 1024),
    )(x, p["ln1_w"], p["ln1_b"], p["wqkv"],
      p["wproj"], p["bproj"], p["ln2_w"], p["ln2_b"],
      p["w1"], p["b1"], p["w2"], p["b2"])


def block_reference(x, params, *, num_heads):
    """Pure-JAX f32 reference mirroring the PyTorch forward."""
    B, N, C = x.shape
    hd = C // num_heads
    scale = hd ** (-0.5)

    def ln(v, w, b):
        mu = jnp.mean(v, axis=-1, keepdims=True)
        var = jnp.mean((v - mu) ** 2, axis=-1, keepdims=True)
        return (v - mu) / jnp.sqrt(var + 1e-5) * w[0] + b[0]

    xn = ln(x, params["ln1_w"], params["ln1_b"])
    qkv = xn @ params["wqkv"]                                # (B, N, 3C)
    qkv = qkv.reshape(B, N, 3, num_heads, hd).transpose(2, 0, 3, 1, 4)
    q, k, v = qkv[0], qkv[1], qkv[2]                         # (B, H, N, hd)
    attn = (q @ jnp.swapaxes(k, -2, -1)) * scale
    attn = jax.nn.softmax(attn, axis=-1)
    ctx = (attn @ v).transpose(0, 2, 1, 3).reshape(B, N, C)
    x = x + ctx @ params["wproj"] + params["bproj"][0]

    xn2 = ln(x, params["ln2_w"], params["ln2_b"])
    h = xn2 @ params["w1"] + params["b1"][0]
    h = 0.5 * h * (1.0 + lax.erf(h / math.sqrt(2.0)))
    x = x + h @ params["w2"] + params["b2"][0]
    return x


def init_params(key, dim, num_heads, mlp_ratio=4.0, dtype=jnp.float32):
    hidden = int(dim * mlp_ratio)
    ks = jax.random.split(key, 6)
    s = 0.02
    return {
        "ln1_w": jnp.ones((1, dim), dtype),
        "ln1_b": jnp.zeros((1, dim), dtype),
        # stored as (in, out) so the kernel does x @ W directly
        "wqkv": (s * jax.random.normal(ks[0], (dim, 3 * dim))).astype(dtype),
        "wproj": (s * jax.random.normal(ks[1], (dim, dim))).astype(dtype),
        "bproj": (s * jax.random.normal(ks[2], (1, dim))).astype(dtype),
        "ln2_w": jnp.ones((1, dim), dtype),
        "ln2_b": jnp.zeros((1, dim), dtype),
        "w1": (s * jax.random.normal(ks[3], (dim, hidden))).astype(dtype),
        "b1": jnp.zeros((1, hidden), dtype),
        "w2": (s * jax.random.normal(ks[4], (hidden, dim))).astype(dtype),
        "b2": jnp.zeros((1, dim), dtype),
    }


if __name__ == "__main__":
    B, N, C = 2, 8, 32
    num_heads = 4

    key = jax.random.PRNGKey(0)
    k_x, k_p = jax.random.split(key)
    x = jax.random.normal(k_x, (B, N, C), dtype=jnp.float32)
    params = init_params(k_p, C, num_heads)

    out = block_forward(x, params, num_heads=num_heads)
    out = jax.block_until_ready(out)

    ref = block_reference(x, params, num_heads=num_heads)
    assert out.shape == (B, N, C)
    # bf16 matmul operands in the kernel vs. f32 reference -> relaxed tolerance.
    assert jnp.allclose(out, ref, atol=2e-2, rtol=2e-2), "mismatch vs reference"

    print("KERNEL_OK")
</pallas_src>

<mosaic_0001>
module attributes {stable_mosaic.version = 11 : i64} {
  func.func @_block_kernel(%arg0: i32, %arg1: memref<1x8x32xf32, #tpu.memory_space<vmem>>, %arg2: memref<1x32xf32, #tpu.memory_space<vmem>>, %arg3: memref<1x32xf32, #tpu.memory_space<vmem>>, %arg4: memref<32x96xbf16, #tpu.memory_space<vmem>>, %arg5: memref<4x8x32xbf16, #tpu.memory_space<vmem>>, %arg6: memref<1x32xf32, #tpu.memory_space<vmem>>, %arg7: memref<1x32xf32, #tpu.memory_space<vmem>>, %arg8: memref<1x32xf32, #tpu.memory_space<vmem>>, %arg9: memref<32x128xbf16, #tpu.memory_space<vmem>>, %arg10: memref<1x128xf32, #tpu.memory_space<vmem>>, %arg11: memref<128x32xbf16, #tpu.memory_space<vmem>>, %arg12: memref<1x32xf32, #tpu.memory_space<vmem>>, %arg13: memref<1x8x32xf32, #tpu.memory_space<vmem>>, %arg14: memref<8x32xf32, #tpu.memory_space<vmem>>) attributes {dimension_semantics = [#tpu.dimension_semantics<parallel>], iteration_bounds = array<i64: 2>, scalar_prefetch = 0 : i64, scratch_operands = 1 : i64, tpu.core_type = #tpu.core_type<tc>, window_params = [{transform_indices = @transform_0, window_bounds = array<i64: 1, 8, 32>}, {pipeline_mode = #tpu.pipeline_mode<synchronous>, transform_indices = @transform_1, window_bounds = array<i64: 1, 32>}, {pipeline_mode = #tpu.pipeline_mode<synchronous>, transform_indices = @transform_2, window_bounds = array<i64: 1, 32>}, {pipeline_mode = #tpu.pipeline_mode<synchronous>, transform_indices = @transform_3, window_bounds = array<i64: 32, 96>}, {pipeline_mode = #tpu.pipeline_mode<synchronous>, transform_indices = @transform_4, window_bounds = array<i64: 4, 8, 32>}, {pipeline_mode = #tpu.pipeline_mode<synchronous>, transform_indices = @transform_5, window_bounds = array<i64: 1, 32>}, {pipeline_mode = #tpu.pipeline_mode<synchronous>, transform_indices = @transform_6, window_bounds = array<i64: 1, 32>}, {pipeline_mode = #tpu.pipeline_mode<synchronous>, transform_indices = @transform_7, window_bounds = array<i64: 1, 32>}, {pipeline_mode = #tpu.pipeline_mode<synchronous>, transform_indices = @transform_8, window_bounds = array<i64: 32, 128>}, {pipeline_mode = #tpu.pipeline_mode<synchronous>, transform_indices = @transform_9, window_bounds = array<i64: 1, 128>}, {pipeline_mode = #tpu.pipeline_mode<synchronous>, transform_indices = @transform_10, window_bounds = array<i64: 128, 32>}, {pipeline_mode = #tpu.pipeline_mode<synchronous>, transform_indices = @transform_11, window_bounds = array<i64: 1, 32>}, {transform_indices = @transform_12, window_bounds = array<i64: 1, 8, 32>}]} {
    %c0 = arith.constant 0 : index
    %c0_0 = arith.constant 0 : index
    %c0_1 = arith.constant 0 : index
    %0 = vector.load %arg1[%c0, %c0_0, %c0_1] : memref<1x8x32xf32, #tpu.memory_space<vmem>>, vector<1x8x32xf32>
    %1 = vector.shape_cast %0 : vector<1x8x32xf32> to vector<8x32xf32>
    %c0_2 = arith.constant 0 : index
    %c0_3 = arith.constant 0 : index
    %2 = vector.load %arg2[%c0_2, %c0_3] : memref<1x32xf32, #tpu.memory_space<vmem>>, vector<1x32xf32>
    %3 = vector.shape_cast %2 : vector<1x32xf32> to vector<32xf32>
    %c0_4 = arith.constant 0 : index
    %c0_5 = arith.constant 0 : index
    %4 = vector.load %arg3[%c0_4, %c0_5] : memref<1x32xf32, #tpu.memory_space<vmem>>, vector<1x32xf32>
    %5 = vector.shape_cast %4 : vector<1x32xf32> to vector<32xf32>
    %cst = arith.constant dense<0.000000e+00> : vector<8xf32>
    %6 = vector.multi_reduction <add>, %1, %cst [1] : vector<8x32xf32> to vector<8xf32>
    %7 = vector.shape_cast %6 : vector<8xf32> to vector<8x1xf32>
    %cst_6 = arith.constant 3.200000e+01 : f32
    %8 = vector.broadcast %cst_6 : f32 to vector<8x1xf32>
    %9 = arith.divf %7, %8 : vector<8x1xf32>
    %10 = vector.broadcast %9 : vector<8x1xf32> to vector<8x32xf32>
    %11 = arith.subf %1, %10 : vector<8x32xf32>
    %12 = vector.broadcast %9 : vector<8x1xf32> to vector<8x32xf32>
    %13 = arith.subf %1, %12 : vector<8x32xf32>
    %14 = arith.mulf %11, %13 : vector<8x32xf32>
    %cst_7 = arith.constant dense<0.000000e+00> : vector<8xf32>
    %15 = vector.multi_reduction <add>, %14, %cst_7 [1] : vector<8x32xf32> to vector<8xf32>
    %16 = vector.shape_cast %15 : vector<8xf32> to vector<8x1xf32>
    %cst_8 = arith.constant 3.200000e+01 : f32
    %17 = vector.broadcast %cst_8 : f32 to vector<8x1xf32>
    %18 = arith.divf %16, %17 : vector<8x1xf32>
    %19 = vector.broadcast %9 : vector<8x1xf32> to vector<8x32xf32>
    %20 = arith.subf %1, %19 : vector<8x32xf32>
    %cst_9 = arith.constant 9.99999974E-6 : f32
    %21 = vector.broadcast %cst_9 : f32 to vector<8x1xf32>
    %22 = arith.addf %18, %21 : vector<8x1xf32>
    %23 = math.rsqrt %22 : vector<8x1xf32>
    %24 = vector.broadcast %23 : vector<8x1xf32> to vector<8x32xf32>
    %25 = arith.mulf %20, %24 : vector<8x32xf32>
    %26 = vector.shape_cast %3 : vector<32xf32> to vector<1x32xf32>
    %27 = vector.broadcast %26 : vector<1x32xf32> to vector<8x32xf32>
    %28 = arith.mulf %25, %27 : vector<8x32xf32>
    %29 = vector.shape_cast %5 : vector<32xf32> to vector<1x32xf32>
    %30 = vector.broadcast %29 : vector<1x32xf32> to vector<8x32xf32>
    %31 = arith.addf %28, %30 : vector<8x32xf32>
    %32 = arith.truncf %31 : vector<8x32xf32> to vector<8x32xbf16>
    %c0_10 = arith.constant 0 : index
    %c0_11 = arith.constant 0 : index
    %33 = vector.load %arg4[%c0_10, %c0_11] : memref<32x96xbf16, #tpu.memory_space<vmem>>, vector<32x96xbf16>
    %cst_12 = arith.constant dense<0.000000e+00> : vector<8x96xf32>
    %34 = tpu.matmul %32, %33, %cst_12 {dimension_numbers = #tpu.dot_dimension_numbers<[1], [0], [0], [1], [0, 0, 1, 1], [], []>} : vector<8x32xbf16>, vector<32x96xbf16>, vector<8x96xf32> -> vector<8x96xf32>
    %35 = arith.truncf %34 : vector<8x96xf32> to vector<8x96xbf16>
    %36 = vector.extract_strided_slice %35 {offsets = [0, 0], sizes = [8, 8], strides = [1, 1]} : vector<8x96xbf16> to vector<8x8xbf16>
    %37 = vector.extract_strided_slice %35 {offsets = [0, 32], sizes = [8, 8], strides = [1, 1]} : vector<8x96xbf16> to vector<8x8xbf16>
    %38 = vector.extract_strided_slice %35 {offsets = [0, 64], sizes = [8, 8], strides = [1, 1]} : vector<8x96xbf16> to vector<8x8xbf16>
    %cst_13 = arith.constant dense<0.000000e+00> : vector<8x8xf32>
    %39 = tpu.matmul %36, %37, %cst_13 {dimension_numbers = #tpu.dot_dimension_numbers<[1], [1], [0], [0], [0, 0, 1, 0], [], []>} : vector<8x8xbf16>, vector<8x8xbf16>, vector<8x8xf32> -> vector<8x8xf32>
    %cst_14 = arith.constant dense<0xFF800000> : vector<8xf32>
    %40 = vector.multi_reduction <maximumf>, %39, %cst_14 [1] : vector<8x8xf32> to vector<8xf32>
    %41 = vector.shape_cast %40 : vector<8xf32> to vector<8x1xf32>
    %42 = vector.broadcast %41 : vector<8x1xf32> to vector<8x8xf32>
    %43 = arith.subf %39, %42 : vector<8x8xf32>
    %44 = math.exp %43 : vector<8x8xf32>
    %cst_15 = arith.constant dense<0.000000e+00> : vector<8xf32>
    %45 = vector.multi_reduction <add>, %44, %cst_15 [1] : vector<8x8xf32> to vector<8xf32>
    %46 = vector.shape_cast %45 : vector<8xf32> to vector<8x1xf32>
    %47 = tpu.reciprocal %46 {approx = true} : vector<8x1xf32> -> vector<8x1xf32>
    %48 = vector.broadcast %47 : vector<8x1xf32> to vector<8x8xf32>
    %49 = arith.mulf %44, %48 : vector<8x8xf32>
    %50 = arith.truncf %49 : vector<8x8xf32> to vector<8x8xbf16>
    %cst_16 = arith.constant dense<0.000000e+00> : vector<8x8xf32>
    %51 = tpu.matmul %50, %38, %cst_16 {dimension_numbers = #tpu.dot_dimension_numbers<[1], [0], [0], [1], [0, 0, 1, 1], [], []>} : vector<8x8xbf16>, vector<8x8xbf16>, vector<8x8xf32> -> vector<8x8xf32>
    %52 = arith.truncf %51 : vector<8x8xf32> to vector<8x8xbf16>
    %c0_17 = arith.constant 0 : index
    %c0_18 = arith.constant 0 : index
    %c0_19 = arith.constant 0 : index
    %53 = vector.load %arg5[%c0_17, %c0_18, %c0_19] : memref<4x8x32xbf16, #tpu.memory_space<vmem>>, vector<1x8x32xbf16>
    %54 = vector.shape_cast %53 : vector<1x8x32xbf16> to vector<8x32xbf16>
    %cst_20 = arith.constant dense<0.000000e+00> : vector<8x32xf32>
    %55 = tpu.matmul %52, %54, %cst_20 {dimension_numbers = #tpu.dot_dimension_numbers<[1], [0], [0], [1], [0, 0, 1, 1], [], []>} : vector<8x8xbf16>, vector<8x32xbf16>, vector<8x32xf32> -> vector<8x32xf32>
    %c0_21 = arith.constant 0 : index
    %c0_22 = arith.constant 0 : index
    %56 = vector.load %arg14[%c0_21, %c0_22] : memref<8x32xf32, #tpu.memory_space<vmem>>, vector<8x32xf32>
    tpu.vector_store %arg14[%c0_21, %c0_22], %55 {strides = array<i32>} : memref<8x32xf32, #tpu.memory_space<vmem>>, vector<8x32xf32>,
    %57 = vector.extract_strided_slice %35 {offsets = [0, 8], sizes = [8, 8], strides = [1, 1]} : vector<8x96xbf16> to vector<8x8xbf16>
    %58 = vector.extract_strided_slice %35 {offsets = [0, 40], sizes = [8, 8], strides = [1, 1]} : vector<8x96xbf16> to vector<8x8xbf16>
    %59 = vector.extract_strided_slice %35 {offsets = [0, 72], sizes = [8, 8], strides = [1, 1]} : vector<8x96xbf16> to vector<8x8xbf16>
    %cst_23 = arith.constant dense<0.000000e+00> : vector<8x8xf32>
    %60 = tpu.matmul %57, %58, %cst_23 {dimension_numbers = #tpu.dot_dimension_numbers<[1], [1], [0], [0], [0, 0, 1, 0], [], []>} : vector<8x8xbf16>, vector<8x8xbf16>, vector<8x8xf32> -> vector<8x8xf32>
    %cst_24 = arith.constant dense<0xFF800000> : vector<8xf32>
    %61 = vector.multi_reduction <maximumf>, %60, %cst_24 [1] : vector<8x8xf32> to vector<8xf32>
    %62 = vector.shape_cast %61 : vector<8xf32> to vector<8x1xf32>
    %63 = vector.broadcast %62 : vector<8x1xf32> to vector<8x8xf32>
    %64 = arith.subf %60, %63 : vector<8x8xf32>
    %65 = math.exp %64 : vector<8x8xf32>
    %cst_25 = arith.constant dense<0.000000e+00> : vector<8xf32>
    %66 = vector.multi_reduction <add>, %65, %cst_25 [1] : vector<8x8xf32> to vector<8xf32>
    %67 = vector.shape_cast %66 : vector<8xf32> to vector<8x1xf32>
    %68 = tpu.reciprocal %67 {approx = true} : vector<8x1xf32> -> vector<8x1xf32>
    %69 = vector.broadcast %68 : vector<8x1xf32> to vector<8x8xf32>
    %70 = arith.mulf %65, %69 : vector<8x8xf32>
    %71 = arith.truncf %70 : vector<8x8xf32> to vector<8x8xbf16>
    %cst_26 = arith.constant dense<0.000000e+00> : vector<8x8xf32>
    %72 = tpu.matmul %71, %59, %cst_26 {dimension_numbers = #tpu.dot_dimension_numbers<[1], [0], [0], [1], [0, 0, 1, 1], [], []>} : vector<8x8xbf16>, vector<8x8xbf16>, vector<8x8xf32> -> vector<8x8xf32>
    %73 = arith.truncf %72 : vector<8x8xf32> to vector<8x8xbf16>
    %c1 = arith.constant 1 : index
    %c0_27 = arith.constant 0 : index
    %c0_28 = arith.constant 0 : index
    %74 = vector.load %arg5[%c1, %c0_27, %c0_28] : memref<4x8x32xbf16, #tpu.memory_space<vmem>>, vector<1x8x32xbf16>
    %75 = vector.shape_cast %74 : vector<1x8x32xbf16> to vector<8x32xbf16>
    %cst_29 = arith.constant dense<0.000000e+00> : vector<8x32xf32>
    %76 = tpu.matmul %73, %75, %cst_29 {dimension_numbers = #tpu.dot_dimension_numbers<[1], [0], [0], [1], [0, 0, 1, 1], [], []>} : vector<8x8xbf16>, vector<8x32xbf16>, vector<8x32xf32> -> vector<8x32xf32>
    %c0_30 = arith.constant 0 : index
    %c0_31 = arith.constant 0 : index
    %77 = vector.load %arg14[%c0_30, %c0_31] : memref<8x32xf32, #tpu.memory_space<vmem>>, vector<8x32xf32>
    %78 = arith.addf %77, %76 : vector<8x32xf32>
    %c0_32 = arith.constant 0 : index
    %c0_33 = arith.constant 0 : index
    %79 = vector.load %arg14[%c0_32, %c0_33] : memref<8x32xf32, #tpu.memory_space<vmem>>, vector<8x32xf32>
    tpu.vector_store %arg14[%c0_32, %c0_33], %78 {strides = array<i32>} : memref<8x32xf32, #tpu.memory_space<vmem>>, vector<8x32xf32>,
    %80 = vector.extract_strided_slice %35 {offsets = [0, 16], sizes = [8, 8], strides = [1, 1]} : vector<8x96xbf16> to vector<8x8xbf16>
    %81 = vector.extract_strided_slice %35 {offsets = [0, 48], sizes = [8, 8], strides = [1, 1]} : vector<8x96xbf16> to vector<8x8xbf16>
    %82 = vector.extract_strided_slice %35 {offsets = [0, 80], sizes = [8, 8], strides = [1, 1]} : vector<8x96xbf16> to vector<8x8xbf16>
    %cst_34 = arith.constant dense<0.000000e+00> : vector<8x8xf32>
    %83 = tpu.matmul %80, %81, %cst_34 {dimension_numbers = #tpu.dot_dimension_numbers<[1], [1], [0], [0], [0, 0, 1, 0], [], []>} : vector<8x8xbf16>, vector<8x8xbf16>, vector<8x8xf32> -> vector<8x8xf32>
    %cst_35 = arith.constant dense<0xFF800000> : vector<8xf32>
    %84 = vector.multi_reduction <maximumf>, %83, %cst_35 [1] : vector<8x8xf32> to vector<8xf32>
    %85 = vector.shape_cast %84 : vector<8xf32> to vector<8x1xf32>
    %86 = vector.broadcast %85 : vector<8x1xf32> to vector<8x8xf32>
    %87 = arith.subf %83, %86 : vector<8x8xf32>
    %88 = math.exp %87 : vector<8x8xf32>
    %cst_36 = arith.constant dense<0.000000e+00> : vector<8xf32>
    %89 = vector.multi_reduction <add>, %88, %cst_36 [1] : vector<8x8xf32> to vector<8xf32>
    %90 = vector.shape_cast %89 : vector<8xf32> to vector<8x1xf32>
    %91 = tpu.reciprocal %90 {approx = true} : vector<8x1xf32> -> vector<8x1xf32>
    %92 = vector.broadcast %91 : vector<8x1xf32> to vector<8x8xf32>
    %93 = arith.mulf %88, %92 : vector<8x8xf32>
    %94 = arith.truncf %93 : vector<8x8xf32> to vector<8x8xbf16>
    %cst_37 = arith.constant dense<0.000000e+00> : vector<8x8xf32>
    %95 = tpu.matmul %94, %82, %cst_37 {dimension_numbers = #tpu.dot_dimension_numbers<[1], [0], [0], [1], [0, 0, 1, 1], [], []>} : vector<8x8xbf16>, vector<8x8xbf16>, vector<8x8xf32> -> vector<8x8xf32>
    %96 = arith.truncf %95 : vector<8x8xf32> to vector<8x8xbf16>
    %c2 = arith.constant 2 : index
    %c0_38 = arith.constant 0 : index
    %c0_39 = arith.constant 0 : index
    %97 = vector.load %arg5[%c2, %c0_38, %c0_39] : memref<4x8x32xbf16, #tpu.memory_space<vmem>>, vector<1x8x32xbf16>
    %98 = vector.shape_cast %97 : vector<1x8x32xbf16> to vector<8x32xbf16>
    %cst_40 = arith.constant dense<0.000000e+00> : vector<8x32xf32>
    %99 = tpu.matmul %96, %98, %cst_40 {dimension_numbers = #tpu.dot_dimension_numbers<[1], [0], [0], [1], [0, 0, 1, 1], [], []>} : vector<8x8xbf16>, vector<8x32xbf16>, vector<8x32xf32> -> vector<8x32xf32>
    %c0_41 = arith.constant 0 : index
    %c0_42 = arith.constant 0 : index
    %100 = vector.load %arg14[%c0_41, %c0_42] : memref<8x32xf32, #tpu.memory_space<vmem>>, vector<8x32xf32>
    %101 = arith.addf %100, %99 : vector<8x32xf32>
    %c0_43 = arith.constant 0 : index
    %c0_44 = arith.constant 0 : index
    %102 = vector.load %arg14[%c0_43, %c0_44] : memref<8x32xf32, #tpu.memory_space<vmem>>, vector<8x32xf32>
    tpu.vector_store %arg14[%c0_43, %c0_44], %101 {strides = array<i32>} : memref<8x32xf32, #tpu.memory_space<vmem>>, vector<8x32xf32>,
    %103 = vector.extract_strided_slice %35 {offsets = [0, 24], sizes = [8, 8], strides = [1, 1]} : vector<8x96xbf16> to vector<8x8xbf16>
    %104 = vector.extract_strided_slice %35 {offsets = [0, 56], sizes = [8, 8], strides = [1, 1]} : vector<8x96xbf16> to vector<8x8xbf16>
    %105 = vector.extract_strided_slice %35 {offsets = [0, 88], sizes = [8, 8], strides = [1, 1]} : vector<8x96xbf16> to vector<8x8xbf16>
    %cst_45 = arith.constant dense<0.000000e+00> : vector<8x8xf32>
    %106 = tpu.matmul %103, %104, %cst_45 {dimension_numbers = #tpu.dot_dimension_numbers<[1], [1], [0], [0], [0, 0, 1, 0], [], []>} : vector<8x8xbf16>, vector<8x8xbf16>, vector<8x8xf32> -> vector<8x8xf32>
    %cst_46 = arith.constant dense<0xFF800000> : vector<8xf32>
    %107 = vector.multi_reduction <maximumf>, %106, %cst_46 [1] : vector<8x8xf32> to vector<8xf32>
    %108 = vector.shape_cast %107 : vector<8xf32> to vector<8x1xf32>
    %109 = vector.broadcast %108 : vector<8x1xf32> to vector<8x8xf32>
    %110 = arith.subf %106, %109 : vector<8x8xf32>
    %111 = math.exp %110 : vector<8x8xf32>
    %cst_47 = arith.constant dense<0.000000e+00> : vector<8xf32>
    %112 = vector.multi_reduction <add>, %111, %cst_47 [1] : vector<8x8xf32> to vector<8xf32>
    %113 = vector.shape_cast %112 : vector<8xf32> to vector<8x1xf32>
    %114 = tpu.reciprocal %113 {approx = true} : vector<8x1xf32> -> vector<8x1xf32>
    %115 = vector.broadcast %114 : vector<8x1xf32> to vector<8x8xf32>
    %116 = arith.mulf %111, %115 : vector<8x8xf32>
    %117 = arith.truncf %116 : vector<8x8xf32> to vector<8x8xbf16>
    %cst_48 = arith.constant dense<0.000000e+00> : vector<8x8xf32>
    %118 = tpu.matmul %117, %105, %cst_48 {dimension_numbers = #tpu.dot_dimension_numbers<[1], [0], [0], [1], [0, 0, 1, 1], [], []>} : vector<8x8xbf16>, vector<8x8xbf16>, vector<8x8xf32> -> vector<8x8xf32>
    %119 = arith.truncf %118 : vector<8x8xf32> to vector<8x8xbf16>
    %c3 = arith.constant 3 : index
    %c0_49 = arith.constant 0 : index
    %c0_50 = arith.constant 0 : index
    %120 = vector.load %arg5[%c3, %c0_49, %c0_50] : memref<4x8x32xbf16, #tpu.memory_space<vmem>>, vector<1x8x32xbf16>
    %121 = vector.shape_cast %120 : vector<1x8x32xbf16> to vector<8x32xbf16>
    %cst_51 = arith.constant dense<0.000000e+00> : vector<8x32xf32>
    %122 = tpu.matmul %119, %121, %cst_51 {dimension_numbers = #tpu.dot_dimension_numbers<[1], [0], [0], [1], [0, 0, 1, 1], [], []>} : vector<8x8xbf16>, vector<8x32xbf16>, vector<8x32xf32> -> vector<8x32xf32>
    %c0_52 = arith.constant 0 : index
    %c0_53 = arith.constant 0 : index
    %123 = vector.load %arg14[%c0_52, %c0_53] : memref<8x32xf32, #tpu.memory_space<vmem>>, vector<8x32xf32>
    %124 = arith.addf %123, %122 : vector<8x32xf32>
    %c0_54 = arith.constant 0 : index
    %c0_55 = arith.constant 0 : index
    %125 = vector.load %arg14[%c0_54, %c0_55] : memref<8x32xf32, #tpu.memory_space<vmem>>, vector<8x32xf32>
    tpu.vector_store %arg14[%c0_54, %c0_55], %124 {strides = array<i32>} : memref<8x32xf32, #tpu.memory_space<vmem>>, vector<8x32xf32>,
    %c0_56 = arith.constant 0 : index
    %c0_57 = arith.constant 0 : index
    %126 = vector.load %arg14[%c0_56, %c0_57] : memref<8x32xf32, #tpu.memory_space<vmem>>, vector<8x32xf32>
    %127 = arith.addf %1, %126 : vector<8x32xf32>
    %c0_58 = arith.constant 0 : index
    %c0_59 = arith.constant 0 : index
    %128 = vector.load %arg6[%c0_58, %c0_59] : memref<1x32xf32, #tpu.memory_space<vmem>>, vector<1x32xf32>
    %129 = vector.shape_cast %128 : vector<1x32xf32> to vector<32xf32>
    %130 = vector.shape_cast %129 : vector<32xf32> to vector<1x32xf32>
    %131 = vector.broadcast %130 : vector<1x32xf32> to vector<8x32xf32>
    %132 = arith.addf %127, %131 : vector<8x32xf32>
    %c0_60 = arith.constant 0 : index
    %c0_61 = arith.constant 0 : index
    %133 = vector.load %arg14[%c0_60, %c0_61] : memref<8x32xf32, #tpu.memory_space<vmem>>, vector<8x32xf32>
    tpu.vector_store %arg14[%c0_60, %c0_61], %132 {strides = array<i32>} : memref<8x32xf32, #tpu.memory_space<vmem>>, vector<8x32xf32>,
    %c0_62 = arith.constant 0 : index
    %c0_63 = arith.constant 0 : index
    %134 = vector.load %arg14[%c0_62, %c0_63] : memref<8x32xf32, #tpu.memory_space<vmem>>, vector<8x32xf32>
    %c0_64 = arith.constant 0 : index
    %c0_65 = arith.constant 0 : index
    %135 = vector.load %arg7[%c0_64, %c0_65] : memref<1x32xf32, #tpu.memory_space<vmem>>, vector<1x32xf32>
    %136 = vector.shape_cast %135 : vector<1x32xf32> to vector<32xf32>
    %c0_66 = arith.constant 0 : index
    %c0_67 = arith.constant 0 : index
    %137 = vector.load %arg8[%c0_66, %c0_67] : memref<1x32xf32, #tpu.memory_space<vmem>>, vector<1x32xf32>
    %138 = vector.shape_cast %137 : vector<1x32xf32> to vector<32xf32>
    %cst_68 = arith.constant dense<0.000000e+00> : vector<8xf32>
    %139 = vector.multi_reduction <add>, %134, %cst_68 [1] : vector<8x32xf32> to vector<8xf32>
    %140 = vector.shape_cast %139 : vector<8xf32> to vector<8x1xf32>
    %cst_69 = arith.constant 3.200000e+01 : f32
    %141 = vector.broadcast %cst_69 : f32 to vector<8x1xf32>
    %142 = arith.divf %140, %141 : vector<8x1xf32>
    %143 = vector.broadcast %142 : vector<8x1xf32> to vector<8x32xf32>
    %144 = arith.subf %134, %143 : vector<8x32xf32>
    %145 = vector.broadcast %142 : vector<8x1xf32> to vector<8x32xf32>
    %146 = arith.subf %134, %145 : vector<8x32xf32>
    %147 = arith.mulf %144, %146 : vector<8x32xf32>
    %cst_70 = arith.constant dense<0.000000e+00> : vector<8xf32>
    %148 = vector.multi_reduction <add>, %147, %cst_70 [1] : vector<8x32xf32> to vector<8xf32>
    %149 = vector.shape_cast %148 : vector<8xf32> to vector<8x1xf32>
    %cst_71 = arith.constant 3.200000e+01 : f32
    %150 = vector.broadcast %cst_71 : f32 to vector<8x1xf32>
    %151 = arith.divf %149, %150 : vector<8x1xf32>
    %152 = vector.broadcast %142 : vector<8x1xf32> to vector<8x32xf32>
    %153 = arith.subf %134, %152 : vector<8x32xf32>
    %cst_72 = arith.constant 9.99999974E-6 : f32
    %154 = vector.broadcast %cst_72 : f32 to vector<8x1xf32>
    %155 = arith.addf %151, %154 : vector<8x1xf32>
    %156 = math.rsqrt %155 : vector<8x1xf32>
    %157 = vector.broadcast %156 : vector<8x1xf32> to vector<8x32xf32>
    %158 = arith.mulf %153, %157 : vector<8x32xf32>
    %159 = vector.shape_cast %136 : vector<32xf32> to vector<1x32xf32>
    %160 = vector.broadcast %159 : vector<1x32xf32> to vector<8x32xf32>
    %161 = arith.mulf %158, %160 : vector<8x32xf32>
    %162 = vector.shape_cast %138 : vector<32xf32> to vector<1x32xf32>
    %163 = vector.broadcast %162 : vector<1x32xf32> to vector<8x32xf32>
    %164 = arith.addf %161, %163 : vector<8x32xf32>
    %165 = arith.truncf %164 : vector<8x32xf32> to vector<8x32xbf16>
    %c0_73 = arith.constant 0 : index
    %c0_74 = arith.constant 0 : index
    %166 = vector.load %arg9[%c0_73, %c0_74] : memref<32x128xbf16, #tpu.memory_space<vmem>>, vector<32x128xbf16>
    %cst_75 = arith.constant dense<0.000000e+00> : vector<8x128xf32>
    %167 = tpu.matmul %165, %166, %cst_75 {dimension_numbers = #tpu.dot_dimension_numbers<[1], [0], [0], [1], [0, 0, 1, 1], [], []>} : vector<8x32xbf16>, vector<32x128xbf16>, vector<8x128xf32> -> vector<8x128xf32>
    %c0_76 = arith.constant 0 : index
    %c0_77 = arith.constant 0 : index
    %168 = vector.load %arg10[%c0_76, %c0_77] : memref<1x128xf32, #tpu.memory_space<vmem>>, vector<1x128xf32>
    %169 = vector.shape_cast %168 : vector<1x128xf32> to vector<128xf32>
    %170 = vector.shape_cast %169 : vector<128xf32> to vector<1x128xf32>
    %171 = vector.broadcast %170 : vector<1x128xf32> to vector<8x128xf32>
    %172 = arith.addf %167, %171 : vector<8x128xf32>
    %cst_78 = arith.constant 5.000000e-01 : f32
    %173 = vector.broadcast %cst_78 : f32 to vector<8x128xf32>
    %174 = arith.mulf %173, %172 : vector<8x128xf32>
    %cst_79 = arith.constant 0.707106769 : f32
    %175 = vector.broadcast %cst_79 : f32 to vector<8x128xf32>
    %176 = arith.mulf %172, %175 : vector<8x128xf32>
    %177 = math.erf %176 : vector<8x128xf32>
    %cst_80 = arith.constant 1.000000e+00 : f32
    %178 = vector.broadcast %cst_80 : f32 to vector<8x128xf32>
    %179 = arith.addf %178, %177 : vector<8x128xf32>
    %180 = arith.mulf %174, %179 : vector<8x128xf32>
    %181 = arith.truncf %180 : vector<8x128xf32> to vector<8x128xbf16>
    %c0_81 = arith.constant 0 : index
    %c0_82 = arith.constant 0 : index
    %182 = vector.load %arg11[%c0_81, %c0_82] : memref<128x32xbf16, #tpu.memory_space<vmem>>, vector<128x32xbf16>
    %cst_83 = arith.constant dense<0.000000e+00> : vector<8x32xf32>
    %183 = tpu.matmul %181, %182, %cst_83 {dimension_numbers = #tpu.dot_dimension_numbers<[1], [0], [0], [1], [0, 0, 1, 1], [], []>} : vector<8x128xbf16>, vector<128x32xbf16>, vector<8x32xf32> -> vector<8x32xf32>
    %c0_84 = arith.constant 0 : index
    %c0_85 = arith.constant 0 : index
    %184 = vector.load %arg12[%c0_84, %c0_85] : memref<1x32xf32, #tpu.memory_space<vmem>>, vector<1x32xf32>
    %185 = vector.shape_cast %184 : vector<1x32xf32> to vector<32xf32>
    %186 = vector.shape_cast %185 : vector<32xf32> to vector<1x32xf32>
    %187 = vector.broadcast %186 : vector<1x32xf32> to vector<8x32xf32>
    %188 = arith.addf %183, %187 : vector<8x32xf32>
    %189 = arith.addf %134, %188 : vector<8x32xf32>
    %c0_86 = arith.constant 0 : index
    %c0_87 = arith.constant 0 : index
    %c0_88 = arith.constant 0 : index
    %190 = vector.load %arg13[%c0_86, %c0_87, %c0_88] : memref<1x8x32xf32, #tpu.memory_space<vmem>>, vector<1x8x32xf32>
    %191 = vector.shape_cast %190 : vector<1x8x32xf32> to vector<8x32xf32>
    %192 = vector.shape_cast %189 : vector<8x32xf32> to vector<1x8x32xf32>
    tpu.vector_store %arg13[%c0_86, %c0_87, %c0_88], %192 {strides = array<i32>} : memref<1x8x32xf32, #tpu.memory_space<vmem>>, vector<1x8x32xf32>,
    return
  }
  func.func @transform_0(%arg0: i32) -> (i32, i32, i32) {
    %c0_i32 = arith.constant 0 : i32
    %c0_i32_0 = arith.constant 0 : i32
    %c0_i32_1 = arith.constant 0 : i32
    return %arg0, %c0_i32, %c0_i32_0 : i32, i32, i32
  }
  func.func @transform_1(%arg0: i32) -> (i32, i32) {
    %c0_i32 = arith.constant 0 : i32
    %c0_i32_0 = arith.constant 0 : i32
    %c0_i32_1 = arith.constant 0 : i32
    return %c0_i32, %c0_i32_0 : i32, i32
  }
  func.func @transform_2(%arg0: i32) -> (i32, i32) {
    %c0_i32 = arith.constant 0 : i32
    %c0_i32_0 = arith.constant 0 : i32
    %c0_i32_1 = arith.constant 0 : i32
    return %c0_i32, %c0_i32_0 : i32, i32
  }
  func.func @transform_3(%arg0: i32) -> (i32, i32) {
    %c0_i32 = arith.constant 0 : i32
    %c0_i32_0 = arith.constant 0 : i32
    %c0_i32_1 = arith.constant 0 : i32
    return %c0_i32, %c0_i32_0 : i32, i32
  }
  func.func @transform_4(%arg0: i32) -> (i32, i32, i32) {
    %c0_i32 = arith.constant 0 : i32
    %c0_i32_0 = arith.constant 0 : i32
    %c0_i32_1 = arith.constant 0 : i32
    %c0_i32_2 = arith.constant 0 : i32
    return %c0_i32, %c0_i32_0, %c0_i32_1 : i32, i32, i32
  }
  func.func @transform_5(%arg0: i32) -> (i32, i32) {
    %c0_i32 = arith.constant 0 : i32
    %c0_i32_0 = arith.constant 0 : i32
    %c0_i32_1 = arith.constant 0 : i32
    return %c0_i32, %c0_i32_0 : i32, i32
  }
  func.func @transform_6(%arg0: i32) -> (i32, i32) {
    %c0_i32 = arith.constant 0 : i32
    %c0_i32_0 = arith.constant 0 : i32
    %c0_i32_1 = arith.constant 0 : i32
    return %c0_i32, %c0_i32_0 : i32, i32
  }
  func.func @transform_7(%arg0: i32) -> (i32, i32) {
    %c0_i32 = arith.constant 0 : i32
    %c0_i32_0 = arith.constant 0 : i32
    %c0_i32_1 = arith.constant 0 : i32
    return %c0_i32, %c0_i32_0 : i32, i32
  }
  func.func @transform_8(%arg0: i32) -> (i32, i32) {
    %c0_i32 = arith.constant 0 : i32
    %c0_i32_0 = arith.constant 0 : i32
    %c0_i32_1 = arith.constant 0 : i32
    return %c0_i32, %c0_i32_0 : i32, i32
  }
  func.func @transform_9(%arg0: i32) -> (i32, i32) {
    %c0_i32 = arith.constant 0 : i32
    %c0_i32_0 = arith.constant 0 : i32
    %c0_i32_1 = arith.constant 0 : i32
    return %c0_i32, %c0_i32_0 : i32, i32
  }
  func.func @transform_10(%arg0: i32) -> (i32, i32) {
    %c0_i32 = arith.constant 0 : i32
    %c0_i32_0 = arith.constant 0 : i32
    %c0_i32_1 = arith.constant 0 : i32
    return %c0_i32, %c0_i32_0 : i32, i32
  }
  func.func @transform_11(%arg0: i32) -> (i32, i32) {
    %c0_i32 = arith.constant 0 : i32
    %c0_i32_0 = arith.constant 0 : i32
    %c0_i32_1 = arith.constant 0 : i32
    return %c0_i32, %c0_i32_0 : i32, i32
  }
  func.func @transform_12(%arg0: i32) -> (i32, i32, i32) {
    %c0_i32 = arith.constant 0 : i32
    %c0_i32_0 = arith.constant 0 : i32
    %c0_i32_1 = arith.constant 0 : i32
    return %arg0, %c0_i32, %c0_i32_0 : i32, i32, i32
  }
}

</mosaic_0001>

<llo_original>
// kernel: tpu_custom_call.1
$region0: #{tpu_custom_call.1}
  #allocation0 [shape = 'u32[]', space=smem, size = 0x4, offset = 0x4, fixed_abs, tag = 'smem constant byte address 0x4 - core index']
  #allocation1 [shape = 'u32[72,128]{1,0:T(1,128)}', space=vmem, size = 0x9000, scoped, tag = 'internal scratch']
  #allocation2 [shape = 'f32[8,32]{1,0:T(8,128)}', space=vmem, size = 0x1000, scoped, tag = 'scratch operand']
  %s0 = inlined_call_operand.vmem [shape: f32[2,8,32], index: 0, kind: input, shape index: {}]
  %s1 = inlined_call_operand.vmem [shape: f32[1,32], index: 1, kind: input, shape index: {}]
  %s2 = inlined_call_operand.vmem [shape: f32[1,32], index: 2, kind: input, shape index: {}]
  %s3 = inlined_call_operand.vmem [shape: bf16[32,96], index: 3, kind: input, shape index: {}]
  %s4 = inlined_call_operand.vmem [shape: bf16[4,8,32], index: 4, kind: input, shape index: {}]
  %s5 = inlined_call_operand.vmem [shape: f32[1,32], index: 5, kind: input, shape index: {}]
  %s6 = inlined_call_operand.vmem [shape: f32[1,32], index: 6, kind: input, shape index: {}]
  %s7 = inlined_call_operand.vmem [shape: f32[1,32], index: 7, kind: input, shape index: {}]
  %s8 = inlined_call_operand.vmem [shape: bf16[32,128], index: 8, kind: input, shape index: {}]
  %s9 = inlined_call_operand.vmem [shape: f32[1,128], index: 9, kind: input, shape index: {}]
  %s10 = inlined_call_operand.vmem [shape: bf16[128,32], index: 10, kind: input, shape index: {}]
  %s11 = inlined_call_operand.vmem [shape: f32[1,32], index: 11, kind: input, shape index: {}]
  %s12 = inlined_call_operand.hbm [shape: f32[2,8,32], index: 12, kind: output, shape index: {}]
  %s13 = sld [smem:[#allocation0]]
  $region81: #{tpu_custom_call.1} parent=0
    _
  %s15 = ssub.s32 1, %s13
  %s16 = scalar_select 0, %s15, %s13
  $region1: #{tpu_custom_call.1} parent=0
    #allocation3 [shape = 'u8[8192]{0}', space=vmem, size = 0x2000, scoped, tag = 'output window, operand 0']
    #allocation4 [shape = 's32[2]{0}', space=sflag, size = 0x8, scoped, tag = 'scoped memory for tpu_custom_call.1']
    %17 = vsyncpa [#allocation4], 0
    %s18 = scalar_lea.sflag [#allocation4], 1
    %19 = vsyncpa %s18, 0
    loop: start=0, step=1, limit=4
    $region2: #{tpu_custom_call.1} parent=1 // loop_pre_header
      _
    $region3: #{tpu_custom_call.1} parent=1 // loop_header
      %s21 = sphi 0, %s25
      %p22 = scmp.ge.s32.totalorder %s21, 4
      %s31 = sphi 0, %s33
      %s34 = sphi 0, %s31
      %s35 = sphi 0, %s34
      %s51 = sphi 0, %s35
      %s55 = sphi 0, %s55
      %s57 = sphi 0, %s55
      %s58 = sphi 0, %s57
      %s72 = sphi 0, %s58
      %s76 = sphi 0, %s76
      %s78 = sphi 0, %s76
      %s79 = sphi 0, %s78
      %s93 = sphi 0, %s79
      %s97 = sphi 0, %s97
      %s99 = sphi 0, %s97
      %s100 = sphi 0, %s99
      %s114 = sphi 0, %s100
      %s118 = sphi 0, %s118
      %s120 = sphi 0, %s118
      %s121 = sphi 0, %s120
      %s135 = sphi 0, %s121
      %s139 = sphi 0, %s139
      %s141 = sphi 0, %s139
      %s142 = sphi 0, %s141
      %s156 = sphi 0, %s142
      %s160 = sphi 0, %s160
      %s162 = sphi 0, %s160
      %s163 = sphi 0, %s162
      %s177 = sphi 0, %s163
      %s181 = sphi 0, %s181
      %s183 = sphi 0, %s181
      %s184 = sphi 0, %s183
      %s198 = sphi 0, %s184
      %s202 = sphi 0, %s202
      %s204 = sphi 0, %s202
      %s205 = sphi 0, %s204
      %s219 = sphi 0, %s205
      %s223 = sphi 0, %s223
      %s225 = sphi 0, %s223
      %s226 = sphi 0, %s225
      %s240 = sphi 0, %s226
      %s244 = sphi 0, %s244
      %s246 = sphi 0, %s244
      %s247 = sphi 0, %s246
      %s261 = sphi 0, %s247
      %s265 = sphi 0, %s265
      %s267 = sphi 0, %s265
      %s268 = sphi 0, %s267
      %s282 = sphi 0, %s268
      %s288 = sphi 0, %s290
      %s291 = sphi 0, %s288
      %s292 = sphi 0, %s291
      %s308 = sphi 0, %s292
    $region4: #{tpu_custom_call.1} parent=1 // loop_header_branch
      %24 = sbr.rel (%p22) target = $region8
    $region5: #{tpu_custom_call.1} parent=1 // loop_body
      %s26 = ssub.s32 %s21, 1
      %s27 = ssub.s32 %s21, 2
      %s28 = sadd.s32 %s21, 1
      %s29 = ssub.s32 %s21, %s28
      %p30 = scmp.eq.s32.totalorder %s29, 0
      %s32 = sadd.s32 %s31, 1
      %s33 = scalar_select %p30, %s31, %s32
      %p36 = pneg %p30
      %p37 = scmp.eq.s32.totalorder %s21, 1
      %p38 = por %p36, %p37
      %p39 = scmp.ne.s32.totalorder %s31, %s34
      %p40 = scmp.eq.s32.totalorder %s21, 0
      %p41 = por %p39, %p40
      %p42 = scmp.ne.s32.totalorder %s31, %s34
      %p43 = scmp.eq.s32.totalorder %s26, 1
      %p44 = por %p42, %p43
      %p45 = scmp.ne.s32.totalorder %s34, %s35
      %p46 = scmp.eq.s32.totalorder %s26, 0
      %p47 = por %p45, %p46
      %p48 = scmp.ne.s32.totalorder %s34, %s35
      %p49 = scmp.eq.s32.totalorder %s27, 1
      %p50 = por %p48, %p49
      %p52 = scmp.ne.s32.totalorder %s35, %s51
      %p53 = scmp.eq.s32.totalorder %s27, 0
      %p54 = por %p52, %p53
      %s56 = sadd.s32 %s55, 1
      %p59 = scmp.eq.s32.totalorder %s21, 1
      %p60 = scmp.ne.s32.totalorder %s55, %s57
      %p61 = scmp.eq.s32.totalorder %s21, 0
      %p62 = por %p60, %p61
      %p63 = scmp.ne.s32.totalorder %s55, %s57
      %p64 = scmp.eq.s32.totalorder %s26, 1
      %p65 = por %p63, %p64
      %p66 = scmp.ne.s32.totalorder %s57, %s58
      %p67 = scmp.eq.s32.totalorder %s26, 0
      %p68 = por %p66, %p67
      %p69 = scmp.ne.s32.totalorder %s57, %s58
      %p70 = scmp.eq.s32.totalorder %s27, 1
      %p71 = por %p69, %p70
      %p73 = scmp.ne.s32.totalorder %s58, %s72
      %p74 = scmp.eq.s32.totalorder %s27, 0
      %p75 = por %p73, %p74
      %s77 = sadd.s32 %s76, 1
      %p80 = scmp.eq.s32.totalorder %s21, 1
      %p81 = scmp.ne.s32.totalorder %s76, %s78
      %p82 = scmp.eq.s32.totalorder %s21, 0
      %p83 = por %p81, %p82
      %p84 = scmp.ne.s32.totalorder %s76, %s78
      %p85 = scmp.eq.s32.totalorder %s26, 1
      %p86 = por %p84, %p85
      %p87 = scmp.ne.s32.totalorder %s78, %s79
      %p88 = scmp.eq.s32.totalorder %s26, 0
      %p89 = por %p87, %p88
      %p90 = scmp.ne.s32.totalorder %s78, %s79
      %p91 = scmp.eq.s32.totalorder %s27, 1
      %p92 = por %p90, %p91
      %p94 = scmp.ne.s32.totalorder %s79, %s93
      %p95 = scmp.eq.s32.totalorder %s27, 0
      %p96 = por %p94, %p95
      %s98 = sadd.s32 %s97, 1
      %p101 = scmp.eq.s32.totalorder %s21, 1
      %p102 = scmp.ne.s32.totalorder %s97, %s99
      %p103 = scmp.eq.s32.totalorder %s21, 0
      %p104 = por %p102, %p103
      %p105 = scmp.ne.s32.totalorder %s97, %s99
      %p106 = scmp.eq.s32.totalorder %s26, 1
      %p107 = por %p105, %p106
      %p108 = scmp.ne.s32.totalorder %s99, %s100
      %p109 = scmp.eq.s32.totalorder %s26, 0
      %p110 = por %p108, %p109
      %p111 = scmp.ne.s32.totalorder %s99, %s100
      %p112 = scmp.eq.s32.totalorder %s27, 1
      %p113 = por %p111, %p112
      %p115 = scmp.ne.s32.totalorder %s100, %s114
      %p116 = scmp.eq.s32.totalorder %s27, 0
      %p117 = por %p115, %p116
      %s119 = sadd.s32 %s118, 1
      %p122 = scmp.eq.s32.totalorder %s21, 1
      %p123 = scmp.ne.s32.totalorder %s118, %s120
      %p124 = scmp.eq.s32.totalorder %s21, 0
      %p125 = por %p123, %p124
      %p126 = scmp.ne.s32.totalorder %s118, %s120
      %p127 = scmp.eq.s32.totalorder %s26, 1
      %p128 = por %p126, %p127
      %p129 = scmp.ne.s32.totalorder %s120, %s121
      %p130 = scmp.eq.s32.totalorder %s26, 0
      %p131 = por %p129, %p130
      %p132 = scmp.ne.s32.totalorder %s120, %s121
      %p133 = scmp.eq.s32.totalorder %s27, 1
      %p134 = por %p132, %p133
      %p136 = scmp.ne.s32.totalorder %s121, %s135
      %p137 = scmp.eq.s32.totalorder %s27, 0
      %p138 = por %p136, %p137
      %s140 = sadd.s32 %s139, 1
      %p143 = scmp.eq.s32.totalorder %s21, 1
      %p144 = scmp.ne.s32.totalorder %s139, %s141
      %p145 = scmp.eq.s32.totalorder %s21, 0
      %p146 = por %p144, %p145
      %p147 = scmp.ne.s32.totalorder %s139, %s141
      %p148 = scmp.eq.s32.totalorder %s26, 1
      %p149 = por %p147, %p148
      %p150 = scmp.ne.s32.totalorder %s141, %s142
      %p151 = scmp.eq.s32.totalorder %s26, 0
      %p152 = por %p150, %p151
      %p153 = scmp.ne.s32.totalorder %s141, %s142
      %p154 = scmp.eq.s32.totalorder %s27, 1
      %p155 = por %p153, %p154
      %p157 = scmp.ne.s32.totalorder %s142, %s156
      %p158 = scmp.eq.s32.totalorder %s27, 0
      %p159 = por %p157, %p158
      %s161 = sadd.s32 %s160, 1
      %p164 = scmp.eq.s32.totalorder %s21, 1
      %p165 = scmp.ne.s32.totalorder %s160, %s162
      %p166 = scmp.eq.s32.totalorder %s21, 0
      %p167 = por %p165, %p166
      %p168 = scmp.ne.s32.totalorder %s160, %s162
      %p169 = scmp.eq.s32.totalorder %s26, 1
      %p170 = por %p168, %p169
      %p171 = scmp.ne.s32.totalorder %s162, %s163
      %p172 = scmp.eq.s32.totalorder %s26, 0
      %p173 = por %p171, %p172
      %p174 = scmp.ne.s32.totalorder %s162, %s163
      %p175 = scmp.eq.s32.totalorder %s27, 1
      %p176 = por %p174, %p175
      %p178 = scmp.ne.s32.totalorder %s163, %s177
      %p179 = scmp.eq.s32.totalorder %s27, 0
      %p180 = por %p178, %p179
      %s182 = sadd.s32 %s181, 1
      %p185 = scmp.eq.s32.totalorder %s21, 1
      %p186 = scmp.ne.s32.totalorder %s181, %s183
      %p187 = scmp.eq.s32.totalorder %s21, 0
      %p188 = por %p186, %p187
      %p189 = scmp.ne.s32.totalorder %s181, %s183
      %p190 = scmp.eq.s32.totalorder %s26, 1
      %p191 = por %p189, %p190
      %p192 = scmp.ne.s32.totalorder %s183, %s184
      %p193 = scmp.eq.s32.totalorder %s26, 0
      %p194 = por %p192, %p193
      %p195 = scmp.ne.s32.totalorder %s183, %s184
      %p196 = scmp.eq.s32.totalorder %s27, 1
      %p197 = por %p195, %p196
      %p199 = scmp.ne.s32.totalorder %s184, %s198
      %p200 = scmp.eq.s32.totalorder %s27, 0
      %p201 = por %p199, %p200
      %s203 = sadd.s32 %s202, 1
      %p206 = scmp.eq.s32.totalorder %s21, 1
      %p207 = scmp.ne.s32.totalorder %s202, %s204
      %p208 = scmp.eq.s32.totalorder %s21, 0
      %p209 = por %p207, %p208
      %p210 = scmp.ne.s32.totalorder %s202, %s204
      %p211 = scmp.eq.s32.totalorder %s26, 1
      %p212 = por %p210, %p211
      %p213 = scmp.ne.s32.totalorder %s204, %s205
      %p214 = scmp.eq.s32.totalorder %s26, 0
      %p215 = por %p213, %p214
      %p216 = scmp.ne.s32.totalorder %s204, %s205
      %p217 = scmp.eq.s32.totalorder %s27, 1
      %p218 = por %p216, %p217
      %p220 = scmp.ne.s32.totalorder %s205, %s219
      %p221 = scmp.eq.s32.totalorder %s27, 0
      %p222 = por %p220, %p221
      %s224 = sadd.s32 %s223, 1
      %p227 = scmp.eq.s32.totalorder %s21, 1
      %p228 = scmp.ne.s32.totalorder %s223, %s225
      %p229 = scmp.eq.s32.totalorder %s21, 0
      %p230 = por %p228, %p229
      %p231 = scmp.ne.s32.totalorder %s223, %s225
      %p232 = scmp.eq.s32.totalorder %s26, 1
      %p233 = por %p231, %p232
      %p234 = scmp.ne.s32.totalorder %s225, %s226
      %p235 = scmp.eq.s32.totalorder %s26, 0
      %p236 = por %p234, %p235
      %p237 = scmp.ne.s32.totalorder %s225, %s226
      %p238 = scmp.eq.s32.totalorder %s27, 1
      %p239 = por %p237, %p238
      %p241 = scmp.ne.s32.totalorder %s226, %s240
      %p242 = scmp.eq.s32.totalorder %s27, 0
      %p243 = por %p241, %p242
      %s245 = sadd.s32 %s244, 1
      %p248 = scmp.eq.s32.totalorder %s21, 1
      %p249 = scmp.ne.s32.totalorder %s244, %s246
      %p250 = scmp.eq.s32.totalorder %s21, 0
      %p251 = por %p249, %p250
      %p252 = scmp.ne.s32.totalorder %s244, %s246
      %p253 = scmp.eq.s32.totalorder %s26, 1
      %p254 = por %p252, %p253
      %p255 = scmp.ne.s32.totalorder %s246, %s247
      %p256 = scmp.eq.s32.totalorder %s26, 0
      %p257 = por %p255, %p256
      %p258 = scmp.ne.s32.totalorder %s246, %s247
      %p259 = scmp.eq.s32.totalorder %s27, 1
      %p260 = por %p258, %p259
      %p262 = scmp.ne.s32.totalorder %s247, %s261
      %p263 = scmp.eq.s32.totalorder %s27, 0
      %p264 = por %p262, %p263
      %s266 = sadd.s32 %s265, 1
      %p269 = scmp.eq.s32.totalorder %s21, 1
      %p270 = scmp.ne.s32.totalorder %s265, %s267
      %p271 = scmp.eq.s32.totalorder %s21, 0
      %p272 = por %p270, %p271
      %p273 = scmp.ne.s32.totalorder %s265, %s267
      %p274 = scmp.eq.s32.totalorder %s26, 1
      %p275 = por %p273, %p274
      %p276 = scmp.ne.s32.totalorder %s267, %s268
      %p277 = scmp.eq.s32.totalorder %s26, 0
      %p278 = por %p276, %p277
      %p279 = scmp.ne.s32.totalorder %s267, %s268
      %p280 = scmp.eq.s32.totalorder %s27, 1
      %p281 = por %p279, %p280
      %p283 = scmp.ne.s32.totalorder %s268, %s282
      %p284 = scmp.eq.s32.totalorder %s27, 0
      %p285 = por %p283, %p284
      %s286 = ssub.s32 %s21, %s28
      %p287 = scmp.eq.s32.totalorder %s286, 0
      %s289 = sadd.s32 %s288, 1
      %s290 = scalar_select %p287, %s288, %s289
      %p293 = pneg %p287
      %p294 = scmp.eq.s32.totalorder %s21, 1
      %p295 = por %p293, %p294
      %p296 = scmp.ne.s32.totalorder %s288, %s291
      %p297 = scmp.eq.s32.totalorder %s21, 0
      %p298 = por %p296, %p297
      %p299 = scmp.ne.s32.totalorder %s288, %s291
      %p300 = scmp.eq.s32.totalorder %s26, 1
      %p301 = por %p299, %p300
      %p302 = scmp.ne.s32.totalorder %s291, %s292
      %p303 = scmp.eq.s32.totalorder %s26, 0
      %p304 = por %p302, %p303
      %p305 = scmp.ne.s32.totalorder %s291, %s292
      %p306 = scmp.eq.s32.totalorder %s27, 1
      %p307 = por %p305, %p306
      %p309 = scmp.ne.s32.totalorder %s292, %s308
      %p310 = scmp.eq.s32.totalorder %s27, 0
      %p311 = por %p309, %p310
      %p312 = scmp.le.s32.totalorder 1, %s21
      %p313 = scmp.lt.s32.totalorder %s21, 3
      %p314 = pnand %p312, %p313
      %p315 = pneg %p314
      // Predicated region
      $region9: #{tpu_custom_call.1} parent=5 // pred_check
        _
      $region10: #{tpu_custom_call.1} parent=5 // pred_check_branch
        %317 = sbr.rel (%p314) target = $region12
      $region11: #{tpu_custom_call.1} parent=5 // pred_region
        %s318 = ssub.s32 %s21, 1
        // Predicated region
        $region13: #{tpu_custom_call.1} parent=11 // pred_check
          %p319 = pneg %p68
        $region14: #{tpu_custom_call.1} parent=11 // pred_check_branch
          %321 = sbr.rel (%p319) target = $region16
        $region15: #{tpu_custom_call.1} parent=11 // pred_region
          _
        $region16: #{tpu_custom_call.1} parent=11 // pred_fallthru
          _
        // Predicated region
        $region17: #{tpu_custom_call.1} parent=11 // pred_check
          %p322 = pneg %p89
        $region18: #{tpu_custom_call.1} parent=11 // pred_check_branch
          %324 = sbr.rel (%p322) target = $region20
        $region19: #{tpu_custom_call.1} parent=11 // pred_region
          _
        $region20: #{tpu_custom_call.1} parent=11 // pred_fallthru
          _
        // Predicated region
        $region21: #{tpu_custom_call.1} parent=11 // pred_check
          %p325 = pneg %p110
        $region22: #{tpu_custom_call.1} parent=11 // pred_check_branch
          %327 = sbr.rel (%p325) target = $region24
        $region23: #{tpu_custom_call.1} parent=11 // pred_region
          _
        $region24: #{tpu_custom_call.1} parent=11 // pred_fallthru
          _
        // Predicated region
        $region25: #{tpu_custom_call.1} parent=11 // pred_check
          %p328 = pneg %p131
        $region26: #{tpu_custom_call.1} parent=11 // pred_check_branch
          %330 = sbr.rel (%p328) target = $region28
        $region27: #{tpu_custom_call.1} parent=11 // pred_region
          _
        $region28: #{tpu_custom_call.1} parent=11 // pred_fallthru
          _
        // Predicated region
        $region29: #{tpu_custom_call.1} parent=11 // pred_check
          %p331 = pneg %p152
        $region30: #{tpu_custom_call.1} parent=11 // pred_check_branch
          %333 = sbr.rel (%p331) target = $region32
        $region31: #{tpu_custom_call.1} parent=11 // pred_region
          _
        $region32: #{tpu_custom_call.1} parent=11 // pred_fallthru
          _
        // Predicated region
        $region33: #{tpu_custom_call.1} parent=11 // pred_check
          %p334 = pneg %p173
        $region34: #{tpu_custom_call.1} parent=11 // pred_check_branch
          %336 = sbr.rel (%p334) target = $region36
        $region35: #{tpu_custom_call.1} parent=11 // pred_region
          _
        $region36: #{tpu_custom_call.1} parent=11 // pred_fallthru
          _
        // Predicated region
        $region37: #{tpu_custom_call.1} parent=11 // pred_check
          %p337 = pneg %p194
        $region38: #{tpu_custom_call.1} parent=11 // pred_check_branch
          %339 = sbr.rel (%p337) target = $region40
        $region39: #{tpu_custom_call.1} parent=11 // pred_region
          _
        $region40: #{tpu_custom_call.1} parent=11 // pred_fallthru
          _
        // Predicated region
        $region41: #{tpu_custom_call.1} parent=11 // pred_check
          %p340 = pneg %p215
        $region42: #{tpu_custom_call.1} parent=11 // pred_check_branch
          %342 = sbr.rel (%p340) target = $region44
        $region43: #{tpu_custom_call.1} parent=11 // pred_region
          _
        $region44: #{tpu_custom_call.1} parent=11 // pred_fallthru
          _
        // Predicated region
        $region45: #{tpu_custom_call.1} parent=11 // pred_check
          %p343 = pneg %p236
        $region46: #{tpu_custom_call.1} parent=11 // pred_check_branch
          %345 = sbr.rel (%p343) target = $region48
        $region47: #{tpu_custom_call.1} parent=11 // pred_region
          _
        $region48: #{tpu_custom_call.1} parent=11 // pred_fallthru
          _
        // Predicated region
        $region49: #{tpu_custom_call.1} parent=11 // pred_check
          %p346 = pneg %p257
        $region50: #{tpu_custom_call.1} parent=11 // pred_check_branch
          %348 = sbr.rel (%p346) target = $region52
        $region51: #{tpu_custom_call.1} parent=11 // pred_region
          _
        $region52: #{tpu_custom_call.1} parent=11 // pred_fallthru
          _
        // Predicated region
        $region53: #{tpu_custom_call.1} parent=11 // pred_check
          %p349 = pneg %p278
        $region54: #{tpu_custom_call.1} parent=11 // pred_check_branch
          %351 = sbr.rel (%p349) target = $region56
        $region55: #{tpu_custom_call.1} parent=11 // pred_region
          _
        $region56: #{tpu_custom_call.1} parent=11 // pred_fallthru
          _
      $region12: #{tpu_custom_call.1} parent=5 // pred_fallthru
        _
      %p352 = scmp.lt.s32.totalorder %s21, 2
      // Predicated region
      $region57: #{tpu_custom_call.1} parent=5 // pred_check
        %p353 = pneg %p352
      $region58: #{tpu_custom_call.1} parent=5 // pred_check_branch
        %355 = sbr.rel (%p353) target = $region60
      $region59: #{tpu_custom_call.1} parent=5 // pred_region
        // Predicated region
        $region61: #{tpu_custom_call.1} parent=59 // pred_check
          %p356 = pneg %p41
        $region62: #{tpu_custom_call.1} parent=59 // pred_check_branch
          %358 = sbr.rel (%p356) target = $region64
        $region63: #{tpu_custom_call.1} parent=59 // pred_region
          %p359 = scmp.lt.s32.totalorder %s21, 1
          %s360 = scalar_select %p359, %s21, 1
          %s361 = smul.addr %s360, 8
          %s362 = scalar_lea.vmem %s0, %s361
        $region64: #{tpu_custom_call.1} parent=59 // pred_fallthru
          _
      $region60: #{tpu_custom_call.1} parent=5 // pred_fallthru
        _
      %p363 = scmp.le.s32.totalorder 1, %s21
      %p364 = scmp.lt.s32.totalorder %s21, 3
      %p365 = pnand %p363, %p364
      %p366 = pneg %p365
      // Predicated region
      $region65: #{tpu_custom_call.1} parent=5 // pred_check
        _
      $region66: #{tpu_custom_call.1} parent=5 // pred_check_branch
        %368 = sbr.rel (%p365) target = $region68
      $region67: #{tpu_custom_call.1} parent=5 // pred_region
        %s369 = ssub.s32 %s21, 1
        %p370 = scmp.lt.s32.totalorder %s26, 1
        %s371 = scalar_select %p370, %s26, 1
        %s372 = smul.addr %s371, 8
        %s373 = scalar_lea.vmem %s0, %s372
        %p374 = pneg %p47
        %p375 = pneg %p44
        %p376 = pneg %p68
        %p377 = pneg %p65
        %p378 = pneg %p89
        %p379 = pneg %p86
        %p380 = pneg %p110
        %p381 = pneg %p107
        %p382 = pneg %p131
        %p383 = pneg %p128
        %p384 = pneg %p152
        %p385 = pneg %p149
        %p386 = pneg %p173
        %p387 = pneg %p170
        %p388 = pneg %p194
        %p389 = pneg %p191
        %p390 = pneg %p215
        %p391 = pneg %p212
        %p392 = pneg %p236
        %p393 = pneg %p233
        %p394 = pneg %p257
        %p395 = pneg %p254
        %p396 = pneg %p278
        %p397 = pneg %p275
        %p398 = pneg %p304
        %p399 = pneg %p301
        %s400 = sand.u32 %s291, 1
        %s401 = scalar_lea.sflag [#allocation4], %s400
        %s402 = sand.u32 %s291, 1
        %s403 = smul.addr %s402, 8
        %s404 = scalar_lea.vmem [#allocation3], %s403
        %p405 = scmp.lt.s32.totalorder %s26, 1
        %s406 = scalar_select %p405, %s26, 1
        %s407 = smul.addr %s406, 8
        %s408 = scalar_lea.vmem %s0, %s407
        %v410 = vld [vmem:[%s408] sm:$0xff]
        %v411 = vld [vmem:[%s1] sm:$0x1]
        %v412 = vld [vmem:[%s2] sm:$0x1]
        %vm413 = vcmask 261120
        %v414 = vsel %vm413, %v410, 0.0
        %415 = vadd.xlane.f32.xlu0 %v414
        %v416 = vpop.xlane.xlu0 %415
        %v417 = vrcp.pop 32.0
        %v418 = vmul.f32 32.0, %v417
        %v419 = vsub.f32 1.0, %v418
        %v420 = vmul.f32 %v417, %v419
        %v421 = vadd.f32 %v417, %v420
        %vm422 = vweird.f32 %v417
        %v423 = vsel %vm422, %v417, %v421
        %v424 = vmul.f32 %v416, %v423
        %v425 = vsub.f32 %v410, %v424
        %v426 = vmul.f32 %v425, %v425
        %v427 = vsel %vm413, %v426, 0.0
        %428 = vadd.xlane.f32.xlu0 %v427
        %v429 = vpop.xlane.xlu0 %428
        %v430 = vmul.f32 %v429, %v423
        %v431 = vadd.f32 %v430, 1e-05
        %v432 = vrsqrt.pop %v431
        %v433 = vmul.f32 %v432, %v431
        %v434 = vmul.f32 %v433, %v432
        %v435 = vmul.f32 0.5, %v434
        %v436 = vsub.f32 1.5, %v435
        %v437 = vmul.f32 %v432, %v436
        %vm438 = vweird.f32 %v431
        %vm439 = vweird.f32 %v432
        %vm440 = vmor %vm438, %vm439
        %v441 = vsel %vm440, %v432, %v437
        %v442 = vmul.f32 %v425, %v441
        %v444 = vperm.slane %v411, 0
        %v446 = vmul.f32 %v442, %v444
        %v448 = vperm.slane %v412, 0
        %v450 = vadd.f32 %v446, %v448
        %v451 = vpack.c.bf16 %v450, %v450
        %v452 = vld [vmem:[%s3] sm:$0xf]
        %v453 = vld [vmem:[%s3 + $0x4] sm:$0xf]
        %v454 = vld [vmem:[%s3 + $0x8] sm:$0xf]
        %v455 = vld [vmem:[%s3 + $0xc] sm:$0xf]
        %v460 = vunpack.c.l.b16 %v452
        %v461 = vunpack.c.l.b16 %v453
        %v462 = vunpack.c.l.b16 %v454
        %v463 = vunpack.c.l.b16 %v455
        %v464 = vpack.c.b16 %v461, %v460
        %v465 = vpack.c.b16 %v463, %v462
        %v469 = vsel %vm413, %v451, 0
        %471 = vmatpush.bf16.msra.mxu0 0
        %472 = vmatpush.bf16.msra.mxu0 0
        %473 = vmatpush.bf16.msra.mxu0 0
        %474 = vmatpush.bf16.msra.mxu0 0
        %475 = vmatpush.bf16.msra.mxu0 0
        %476 = vmatpush.bf16.msra.mxu0 0
        %477 = vmatpush.bf16.msra.mxu0 %v465
        %478 = vmatpush.bf16.msra.mxu0 %v464
        %479 = vmatmul.bf16.gmra.mxu0 %v469
        %v480 = vpop.f32.mrf.mxu0
        %v481 = vadd.f32 0.0, %v480
        %v482 = vpop.f32.mrf.mxu0
        %483 = vdwg.mxu0
        %v484 = vpack.c.bf16 %v481, %v481
        %v486 = vunpack.c.l.b16 %v484
        %v487 = vpack.c.b16 %v486, %v486
        %488 = vrot.lane.b32.xlu0 %v487, 96
        %v489 = vpop.permute.xlu0 %488
        %vm490 = vcmask 64512
        %v492 = vsel %vm490, %v484, 0
        %v495 = vsel %vm490, %v489, 0
        %497 = vmatpush.bf16.xpose.msra.mxu0 0
        %498 = vmatpush.bf16.xpose.msra.mxu0 0
        %499 = vmatpush.bf16.xpose.msra.mxu0 0
        %500 = vmatpush.bf16.xpose.msra.mxu0 0
        %501 = vmatpush.bf16.xpose.msra.mxu0 0
        %502 = vmatpush.bf16.xpose.msra.mxu0 0
        %503 = vmatpush.bf16.xpose.msra.mxu0 0
        %504 = vmatpush.bf16.xpose.msra.mxu0 %v495
        %505 = vmatmul.bf16.gmra.mxu0 %v492
        %v506 = vpop.f32.mrf.mxu0
        %v507 = vadd.f32 0.0, %v506
        %v508 = vpop.f32.mrf.mxu0
        %509 = vdwg.mxu0
        %v510 = vsel %vm490, %v507, -inf
        %511 = vmax.xlane.f32.xlu0 %v510
        %v512 = vpop.xlane.xlu0 %511
        %v513 = vsub.f32 %v507, %v512
        %v514 = vmul.f32 %v513, 1.442695
        %v515 = vpow.pop %v514
        %v516 = vsel %vm490, %v515, 0.0
        %517 = vadd.xlane.f32.xlu0 %v516
        %v518 = vpop.xlane.xlu0 %517
        %v519 = vrcp.pop %v518
        %v520 = vmul.f32 %v515, %v519
        %v521 = vpack.c.bf16 %v520, %v520
        %522 = vrot.lane.b32.xlu0 %v487, 64
        %v523 = vpop.permute.xlu0 %522
        %v525 = vsel %vm490, %v521, 0
        %vm527 = vcmask 1043456
        %v529 = vsel %vm527, %v523, 0
        %531 = vmatpush.bf16.msra.mxu0 0
        %532 = vmatpush.bf16.msra.mxu0 0
        %533 = vmatpush.bf16.msra.mxu0 0
        %534 = vmatpush.bf16.msra.mxu0 0
        %535 = vmatpush.bf16.msra.mxu0 0
        %536 = vmatpush.bf16.msra.mxu0 0
        %537 = vmatpush.bf16.msra.mxu0 0
        %538 = vmatpush.bf16.msra.mxu0 %v529
        %539 = vmatmul.bf16.gmra.mxu0 %v525
        %v540 = vpop.f32.mrf.mxu0
        %v541 = vadd.f32 0.0, %v540
        %v542 = vpop.f32.mrf.mxu0
        %543 = vdwg.mxu0
        %v544 = vpack.c.bf16 %v541, %v541
        %v545 = vld [vmem:[%s4] sm:$0xf]
        %v547 = vsel %vm490, %v544, 0
        %v550 = vsel %vm527, %v545, 0
        %552 = vmatpush.bf16.msra.mxu0 0
        %553 = vmatpush.bf16.msra.mxu0 0
        %554 = vmatpush.bf16.msra.mxu0 0
        %555 = vmatpush.bf16.msra.mxu0 0
        %556 = vmatpush.bf16.msra.mxu0 0
        %557 = vmatpush.bf16.msra.mxu0 0
        %558 = vmatpush.bf16.msra.mxu0 0
        %559 = vmatpush.bf16.msra.mxu0 %v550
        %560 = vmatmul.bf16.gmra.mxu0 %v547
        %v561 = vpop.f32.mrf.mxu0
        %v562 = vadd.f32 0.0, %v561
        %v563 = vpop.f32.mrf.mxu0
        %564 = vdwg.mxu0
        %565 = vst.msk [vmem:[#allocation2] sm:$0xff] %vm413, %v562
        %566 = vrot.lane.b32.xlu0 %v487, 120
        %v567 = vpop.permute.xlu0 %566
        %568 = vrot.lane.b32.xlu0 %v487, 88
        %v569 = vpop.permute.xlu0 %568
        %v571 = vsel %vm490, %v567, 0
        %v574 = vsel %vm490, %v569, 0
        %576 = vmatpush.bf16.xpose.msra.mxu0 0
        %577 = vmatpush.bf16.xpose.msra.mxu0 0
        %578 = vmatpush.bf16.xpose.msra.mxu0 0
        %579 = vmatpush.bf16.xpose.msra.mxu0 0
        %580 = vmatpush.bf16.xpose.msra.mxu0 0
        %581 = vmatpush.bf16.xpose.msra.mxu0 0
        %582 = vmatpush.bf16.xpose.msra.mxu0 0
        %583 = vmatpush.bf16.xpose.msra.mxu0 %v574
        %584 = vmatmul.bf16.gmra.mxu0 %v571
        %v585 = vpop.f32.mrf.mxu0
        %v586 = vadd.f32 0.0, %v585
        %v587 = vpop.f32.mrf.mxu0
        %588 = vdwg.mxu0
        %v589 = vsel %vm490, %v586, -inf
        %590 = vmax.xlane.f32.xlu0 %v589
        %v591 = vpop.xlane.xlu0 %590
        %v592 = vsub.f32 %v586, %v591
        %v593 = vmul.f32 %v592, 1.442695
        %v594 = vpow.pop %v593
        %v595 = vsel %vm490, %v594, 0.0
        %596 = vadd.xlane.f32.xlu0 %v595
        %v597 = vpop.xlane.xlu0 %596
        %v598 = vrcp.pop %v597
        %v599 = vmul.f32 %v594, %v598
        %v600 = vpack.c.bf16 %v599, %v599
        %601 = vrot.lane.b32.xlu0 %v487, 56
        %v602 = vpop.permute.xlu0 %601
        %v604 = vsel %vm490, %v600, 0
        %v607 = vsel %vm527, %v602, 0
        %609 = vmatpush.bf16.msra.mxu0 0
        %610 = vmatpush.bf16.msra.mxu0 0
        %611 = vmatpush.bf16.msra.mxu0 0
        %612 = vmatpush.bf16.msra.mxu0 0
        %613 = vmatpush.bf16.msra.mxu0 0
        %614 = vmatpush.bf16.msra.mxu0 0
        %615 = vmatpush.bf16.msra.mxu0 0
        %616 = vmatpush.bf16.msra.mxu0 %v607
        %617 = vmatmul.bf16.gmra.mxu0 %v604
        %v618 = vpop.f32.mrf.mxu0
        %v619 = vadd.f32 0.0, %v618
        %v620 = vpop.f32.mrf.mxu0
        %621 = vdwg.mxu0
        %v622 = vpack.c.bf16 %v619, %v619
        %s623 = scalar_lea.vmem %s4, 4
        %v624 = vld [vmem:[%s623] sm:$0xf]
        %v626 = vsel %vm490, %v622, 0
        %v629 = vsel %vm527, %v624, 0
        %631 = vmatpush.bf16.msra.mxu0 0
        %632 = vmatpush.bf16.msra.mxu0 0
        %633 = vmatpush.bf16.msra.mxu0 0
        %634 = vmatpush.bf16.msra.mxu0 0
        %635 = vmatpush.bf16.msra.mxu0 0
        %636 = vmatpush.bf16.msra.mxu0 0
        %637 = vmatpush.bf16.msra.mxu0 0
        %638 = vmatpush.bf16.msra.mxu0 %v629
        %639 = vmatmul.bf16.gmra.mxu0 %v626
        %v640 = vpop.f32.mrf.mxu0
        %v641 = vadd.f32 0.0, %v640
        %v642 = vpop.f32.mrf.mxu0
        %643 = vdwg.mxu0
        %v644 = vld [vmem:[#allocation2] sm:$0xff]
        %v645 = vadd.f32 %v644, %v641
        %646 = vst.msk [vmem:[#allocation2] sm:$0xff] %vm413, %v645
        %647 = vrot.lane.b32.xlu0 %v487, 112
        %v648 = vpop.permute.xlu0 %647
        %649 = vrot.lane.b32.xlu0 %v487, 80
        %v650 = vpop.permute.xlu0 %649
        %v652 = vsel %vm490, %v648, 0
        %v655 = vsel %vm490, %v650, 0
        %657 = vmatpush.bf16.xpose.msra.mxu0 0
        %658 = vmatpush.bf16.xpose.msra.mxu0 0
        %659 = vmatpush.bf16.xpose.msra.mxu0 0
        %660 = vmatpush.bf16.xpose.msra.mxu0 0
        %661 = vmatpush.bf16.xpose.msra.mxu0 0
        %662 = vmatpush.bf16.xpose.msra.mxu0 0
        %663 = vmatpush.bf16.xpose.msra.mxu0 0
        %664 = vmatpush.bf16.xpose.msra.mxu0 %v655
        %665 = vmatmul.bf16.gmra.mxu0 %v652
        %v666 = vpop.f32.mrf.mxu0
        %v667 = vadd.f32 0.0, %v666
        %v668 = vpop.f32.mrf.mxu0
        %669 = vdwg.mxu0
        %v670 = vsel %vm490, %v667, -inf
        %671 = vmax.xlane.f32.xlu0 %v670
        %v672 = vpop.xlane.xlu0 %671
        %v673 = vsub.f32 %v667, %v672
        %v674 = vmul.f32 %v673, 1.442695
        %v675 = vpow.pop %v674
        %v676 = vsel %vm490, %v675, 0.0
        %677 = vadd.xlane.f32.xlu0 %v676
        %v678 = vpop.xlane.xlu0 %677
        %v679 = vrcp.pop %v678
        %v680 = vmul.f32 %v675, %v679
        %v681 = vpack.c.bf16 %v680, %v680
        %682 = vrot.lane.b32.xlu0 %v487, 48
        %v683 = vpop.permute.xlu0 %682
        %v685 = vsel %vm490, %v681, 0
        %v688 = vsel %vm527, %v683, 0
        %690 = vmatpush.bf16.msra.mxu0 0
        %691 = vmatpush.bf16.msra.mxu0 0
        %692 = vmatpush.bf16.msra.mxu0 0
        %693 = vmatpush.bf16.msra.mxu0 0
        %694 = vmatpush.bf16.msra.mxu0 0
        %695 = vmatpush.bf16.msra.mxu0 0
        %696 = vmatpush.bf16.msra.mxu0 0
        %697 = vmatpush.bf16.msra.mxu0 %v688
        %698 = vmatmul.bf16.gmra.mxu0 %v685
        %v699 = vpop.f32.mrf.mxu0
        %v700 = vadd.f32 0.0, %v699
        %v701 = vpop.f32.mrf.mxu0
        %702 = vdwg.mxu0
        %v703 = vpack.c.bf16 %v700, %v700
        %s704 = scalar_lea.vmem %s4, 8
        %v705 = vld [vmem:[%s704] sm:$0xf]
        %v707 = vsel %vm490, %v703, 0
        %v710 = vsel %vm527, %v705, 0
        %712 = vmatpush.bf16.msra.mxu0 0
        %713 = vmatpush.bf16.msra.mxu0 0
        %714 = vmatpush.bf16.msra.mxu0 0
        %715 = vmatpush.bf16.msra.mxu0 0
        %716 = vmatpush.bf16.msra.mxu0 0
        %717 = vmatpush.bf16.msra.mxu0 0
        %718 = vmatpush.bf16.msra.mxu0 0
        %719 = vmatpush.bf16.msra.mxu0 %v710
        %720 = vmatmul.bf16.gmra.mxu0 %v707
        %v721 = vpop.f32.mrf.mxu0
        %v722 = vadd.f32 0.0, %v721
        %v723 = vpop.f32.mrf.mxu0
        %724 = vdwg.mxu0
        %v725 = vld [vmem:[#allocation2] sm:$0xff]
        %v726 = vadd.f32 %v725, %v722
        %727 = vst.msk [vmem:[#allocation2] sm:$0xff] %vm413, %v726
        %728 = vrot.lane.b32.xlu0 %v487, 104
        %v729 = vpop.permute.xlu0 %728
        %730 = vrot.lane.b32.xlu0 %v487, 72
        %v731 = vpop.permute.xlu0 %730
        %v733 = vsel %vm490, %v729, 0
        %v736 = vsel %vm490, %v731, 0
        %738 = vmatpush.bf16.xpose.msra.mxu0 0
        %739 = vmatpush.bf16.xpose.msra.mxu0 0
        %740 = vmatpush.bf16.xpose.msra.mxu0 0
        %741 = vmatpush.bf16.xpose.msra.mxu0 0
        %742 = vmatpush.bf16.xpose.msra.mxu0 0
        %743 = vmatpush.bf16.xpose.msra.mxu0 0
        %744 = vmatpush.bf16.xpose.msra.mxu0 0
        %745 = vmatpush.bf16.xpose.msra.mxu0 %v736
        %746 = vmatmul.bf16.gmra.mxu0 %v733
        %v747 = vpop.f32.mrf.mxu0
        %v748 = vadd.f32 0.0, %v747
        %v749 = vpop.f32.mrf.mxu0
        %750 = vdwg.mxu0
        %v751 = vsel %vm490, %v748, -inf
        %752 = vmax.xlane.f32.xlu0 %v751
        %v753 = vpop.xlane.xlu0 %752
        %v754 = vsub.f32 %v748, %v753
        %v755 = vmul.f32 %v754, 1.442695
        %v756 = vpow.pop %v755
        %v757 = vsel %vm490, %v756, 0.0
        %758 = vadd.xlane.f32.xlu0 %v757
        %v759 = vpop.xlane.xlu0 %758
        %v760 = vrcp.pop %v759
        %v761 = vmul.f32 %v756, %v760
        %v762 = vpack.c.bf16 %v761, %v761
        %763 = vrot.lane.b32.xlu0 %v487, 40
        %v764 = vpop.permute.xlu0 %763
        %v766 = vsel %vm490, %v762, 0
        %v769 = vsel %vm527, %v764, 0
        %771 = vmatpush.bf16.msra.mxu0 0
        %772 = vmatpush.bf16.msra.mxu0 0
        %773 = vmatpush.bf16.msra.mxu0 0
        %774 = vmatpush.bf16.msra.mxu0 0
        %775 = vmatpush.bf16.msra.mxu0 0
        %776 = vmatpush.bf16.msra.mxu0 0
        %777 = vmatpush.bf16.msra.mxu0 0
        %778 = vmatpush.bf16.msra.mxu0 %v769
        %779 = vmatmul.bf16.gmra.mxu0 %v766
        %v780 = vpop.f32.mrf.mxu0
        %v781 = vadd.f32 0.0, %v780
        %v782 = vpop.f32.mrf.mxu0
        %783 = vdwg.mxu0
        %v784 = vpack.c.bf16 %v781, %v781
        %s785 = scalar_lea.vmem %s4, 12
        %v786 = vld [vmem:[%s785] sm:$0xf]
        %v788 = vsel %vm490, %v784, 0
        %v791 = vsel %vm527, %v786, 0
        %793 = vmatpush.bf16.msra.mxu0 0
        %794 = vmatpush.bf16.msra.mxu0 0
        %795 = vmatpush.bf16.msra.mxu0 0
        %796 = vmatpush.bf16.msra.mxu0 0
        %797 = vmatpush.bf16.msra.mxu0 0
        %798 = vmatpush.bf16.msra.mxu0 0
        %799 = vmatpush.bf16.msra.mxu0 0
        %800 = vmatpush.bf16.msra.mxu0 %v791
        %801 = vmatmul.bf16.gmra.mxu0 %v788
        %v802 = vpop.f32.mrf.mxu0
        %v803 = vadd.f32 0.0, %v802
        %v804 = vpop.f32.mrf.mxu0
        %805 = vdwg.mxu0
        %v806 = vld [vmem:[#allocation2] sm:$0xff]
        %v807 = vadd.f32 %v806, %v803
        %808 = vst.msk [vmem:[#allocation2] sm:$0xff] %vm413, %v807
        %v809 = vld [vmem:[#allocation2] sm:$0xff]
        %v810 = vadd.f32 %v410, %v809
        %v811 = vld [vmem:[%s5] sm:$0x1]
        %v813 = vperm.slane %v811, 0
        %v815 = vadd.f32 %v810, %v813
        %816 = vst.msk [vmem:[#allocation2] sm:$0xff] %vm413, %v815
        %v817 = vld [vmem:[#allocation2] sm:$0xff]
        %v818 = vld [vmem:[%s6] sm:$0x1]
        %v819 = vld [vmem:[%s7] sm:$0x1]
        %v820 = vsel %vm413, %v817, 0.0
        %821 = vadd.xlane.f32.xlu0 %v820
        %v822 = vpop.xlane.xlu0 %821
        %v823 = vmul.f32 %v822, %v423
        %v824 = vsub.f32 %v817, %v823
        %v825 = vmul.f32 %v824, %v824
        %v826 = vsel %vm413, %v825, 0.0
        %827 = vadd.xlane.f32.xlu0 %v826
        %v828 = vpop.xlane.xlu0 %827
        %v829 = vmul.f32 %v828, %v423
        %v830 = vadd.f32 %v829, 1e-05
        %v831 = vrsqrt.pop %v830
        %v832 = vmul.f32 %v831, %v830
        %v833 = vmul.f32 %v832, %v831
        %v834 = vmul.f32 0.5, %v833
        %v835 = vsub.f32 1.5, %v834
        %v836 = vmul.f32 %v831, %v835
        %vm837 = vweird.f32 %v830
        %vm838 = vweird.f32 %v831
        %vm839 = vmor %vm837, %vm838
        %v840 = vsel %vm839, %v831, %v836
        %v841 = vmul.f32 %v824, %v840
        %v843 = vperm.slane %v818, 0
        %v845 = vmul.f32 %v841, %v843
        %v847 = vperm.slane %v819, 0
        %v849 = vadd.f32 %v845, %v847
        %v850 = vpack.c.bf16 %v849, %v849
        %v851 = vld [vmem:[%s8] sm:$0xf]
        %v852 = vld [vmem:[%s8 + $0x4] sm:$0xf]
        %v853 = vld [vmem:[%s8 + $0x8] sm:$0xf]
        %v854 = vld [vmem:[%s8 + $0xc] sm:$0xf]
        %v855 = vld [vmem:[%s9] sm:$0x1]
        %v857 = vperm.slane %v855, 0
        %v863 = vunpack.c.l.b16 %v851
        %v864 = vunpack.c.l.b16 %v852
        %v865 = vunpack.c.l.b16 %v853
        %v866 = vunpack.c.l.b16 %v854
        %v867 = vpack.c.b16 %v864, %v863
        %v868 = vpack.c.b16 %v866, %v865
        %v872 = vsel %vm413, %v850, 0
        %874 = vmatpush.bf16.msra.mxu0 0
        %875 = vmatpush.bf16.msra.mxu0 0
        %876 = vmatpush.bf16.msra.mxu0 0
        %877 = vmatpush.bf16.msra.mxu0 0
        %878 = vmatpush.bf16.msra.mxu0 0
        %879 = vmatpush.bf16.msra.mxu0 0
        %880 = vmatpush.bf16.msra.mxu0 %v868
        %881 = vmatpush.bf16.msra.mxu0 %v867
        %882 = vmatmul.bf16.gmra.mxu0 %v872
        %v883 = vpop.f32.mrf.mxu0
        %v884 = vadd.f32 %v857, %v883
        %v885 = vpop.f32.mrf.mxu0
        %886 = vdwg.mxu0
        %v887 = vmul.f32 %v884, 0.5
        %v888 = vmul.f32 %v884, 0.70710677
        %v889 = vmul.f32 %v888, %v888
        %v890 = vmin.f32 16.0, %v889
        %v891 = vmul.f32 %v890, 2.1237322e-06
        %v892 = vadd.f32 %v891, 0.00028619796
        %v893 = vmul.f32 %v890, %v892
        %v894 = vadd.f32 %v893, 0.0036580483
        %v895 = vmul.f32 %v890, %v894
        %v896 = vadd.f32 %v895, 0.05243302
        %v897 = vmul.f32 %v890, %v896
        %v898 = vadd.f32 %v897, 0.18741608
        %v899 = vmul.f32 %v890, %v898
        %v900 = vadd.f32 %v899, 1.1283791
        %v901 = vmul.f32 %v888, %v900
        %v902 = vmul.f32 %v890, 3.8918573e-05
        %v903 = vadd.f32 %v902, 0.001143296
        %v904 = vmul.f32 %v890, %v903
        %v905 = vadd.f32 %v904, 0.014752088
        %v906 = vmul.f32 %v890, %v905
        %v907 = vadd.f32 %v906, 0.112945676
        %v908 = vmul.f32 %v890, %v907
        %v909 = vadd.f32 %v908, 0.4994258
        %v910 = vmul.f32 %v890, %v909
        %v911 = vadd.f32 %v910, 1.0
        %v912 = vrcp.pop %v911
        %v913 = vmul.f32 %v911, %v912
        %v914 = vsub.f32 1.0, %v913
        %v915 = vmul.f32 %v912, %v914
        %v916 = vadd.f32 %v912, %v915
        %vm917 = vweird.f32 %v911
        %vm918 = vweird.f32 %v912
        %vm919 = vmor %vm917, %vm918
        %v920 = vsel %vm919, %v912, %v916
        %v921 = vand.u32 2147483647, %v911
        %vm922 = vcmp.eq.f32.partialorder %v921, 8.507059e+37
        %v923 = vand.u32 %v911, 2147483648
        %v924 = vor.u32 1.1754944e-38, %v923
        %v925 = vsel %vm922, %v924, %v920
        %v926 = vmul.f32 %v901, %v925
        %v927 = vmin.f32 %v926, 1.0
        %v928 = vmax.f32 %v927, -1.0
        %v929 = vadd.f32 %v928, 1.0
        %v930 = vmul.f32 %v887, %v929
        %v931 = vpack.c.bf16 %v930, %v930
        %v932 = vld [vmem:[%s10] sm:$0xf]
        %v933 = vld [vmem:[%s10 + $0x4] sm:$0xf]
        %v934 = vld [vmem:[%s10 + $0x8] sm:$0xf]
        %v935 = vld [vmem:[%s10 + $0xc] sm:$0xf]
        %v936 = vld [vmem:[%s10 + $0x10] sm:$0xf]
        %v937 = vld [vmem:[%s10 + $0x14] sm:$0xf]
        %v938 = vld [vmem:[%s10 + $0x18] sm:$0xf]
        %v939 = vld [vmem:[%s10 + $0x1c] sm:$0xf]
        %v940 = vld [vmem:[%s10 + $0x20] sm:$0xf]
        %v941 = vld [vmem:[%s10 + $0x24] sm:$0xf]
        %v942 = vld [vmem:[%s10 + $0x28] sm:$0xf]
        %v943 = vld [vmem:[%s10 + $0x2c] sm:$0xf]
        %v944 = vld [vmem:[%s10 + $0x30] sm:$0xf]
        %v945 = vld [vmem:[%s10 + $0x34] sm:$0xf]
        %v946 = vld [vmem:[%s10 + $0x38] sm:$0xf]
        %v947 = vld [vmem:[%s10 + $0x3c] sm:$0xf]
        %v948 = vld [vmem:[%s11] sm:$0x1]
        %v950 = vperm.slane %v948, 0
        %v968 = vunpack.c.l.b16 %v932
        %v969 = vunpack.c.l.b16 %v933
        %v970 = vunpack.c.l.b16 %v934
        %v971 = vunpack.c.l.b16 %v935
        %v972 = vunpack.c.l.b16 %v936
        %v973 = vunpack.c.l.b16 %v937
        %v974 = vunpack.c.l.b16 %v938
        %v975 = vunpack.c.l.b16 %v939
        %v976 = vunpack.c.l.b16 %v940
        %v977 = vunpack.c.l.b16 %v941
        %v978 = vunpack.c.l.b16 %v942
        %v979 = vunpack.c.l.b16 %v943
        %v980 = vunpack.c.l.b16 %v944
        %v981 = vunpack.c.l.b16 %v945
        %v982 = vunpack.c.l.b16 %v946
        %v983 = vunpack.c.l.b16 %v947
        %v984 = vpack.c.b16 %v969, %v968
        %v985 = vpack.c.b16 %v971, %v970
        %v986 = vpack.c.b16 %v973, %v972
        %v987 = vpack.c.b16 %v975, %v974
        %v988 = vpack.c.b16 %v977, %v976
        %v989 = vpack.c.b16 %v979, %v978
        %v990 = vpack.c.b16 %v981, %v980
        %v991 = vpack.c.b16 %v983, %v982
        %1000 = vmatpush.bf16.msra.mxu0 %v991
        %1001 = vmatpush.bf16.msra.mxu0 %v990
        %1002 = vmatpush.bf16.msra.mxu0 %v989
        %1003 = vmatpush.bf16.msra.mxu0 %v988
        %1004 = vmatpush.bf16.msra.mxu0 %v987
        %1005 = vmatpush.bf16.msra.mxu0 %v986
        %1006 = vmatpush.bf16.msra.mxu0 %v985
        %1007 = vmatpush.bf16.msra.mxu0 %v984
        %1008 = vmatmul.bf16.gmra.mxu0 %v931
        %v1009 = vpop.f32.mrf.mxu0
        %v1010 = vadd.f32 %v950, %v1009
        %v1011 = vpop.f32.mrf.mxu0
        %1012 = vdwg.mxu0
        %v1013 = vadd.f32 %v817, %v1010
        %1014 = vst.msk [vmem:[%s404] sm:$0xff] %vm413, %v1013
        %s1015 = sand.u32 %s291, 1
        %s1016 = scalar_lea.sflag [#allocation4], %s1015
        %s1017 = sand.u32 %s291, 1
        %s1018 = smul.addr %s1017, 8
        %s1019 = scalar_lea.vmem [#allocation3], %s1018
        // Predicated region
        $region69: #{tpu_custom_call.1} parent=67 // pred_check
          %p1020 = pneg %p301
        $region70: #{tpu_custom_call.1} parent=67 // pred_check_branch
          %1022 = sbr.rel (%p1020) target = $region72
        $region71: #{tpu_custom_call.1} parent=67 // pred_region
          %1024 = vsyncadd %s1016, 0
          %s1025 = smul.addr %s26, 8
          %s1026 = scalar_lea.hbm %s12, %s1025
          %s1028 = sshll.u32 %s1019, 4
          %s1029 = int_to_ptr.vmem [resolvable:$true] %s1028
          %s1030 = sshll.u32 %s1026, 4
          %s1031 = int_to_ptr.hbm [resolvable:$true] %s1030
          %1033 = dma.vmem_to_hbm [thread:$0]  %s1029, 128, %s1031, %s1016
        $region72: #{tpu_custom_call.1} parent=67 // pred_fallthru
          _
      $region68: #{tpu_custom_call.1} parent=5 // pred_fallthru
        _
      %p1034 = scmp.le.s32.totalorder 2, %s21
      // Predicated region
      $region73: #{tpu_custom_call.1} parent=5 // pred_check
        %p1035 = pneg %p1034
      $region74: #{tpu_custom_call.1} parent=5 // pred_check_branch
        %1037 = sbr.rel (%p1035) target = $region76
      $region75: #{tpu_custom_call.1} parent=5 // pred_region
        %s1038 = ssub.s32 %s21, 2
        // Predicated region
        $region77: #{tpu_custom_call.1} parent=75 // pred_check
          %p1039 = pneg %p307
        $region78: #{tpu_custom_call.1} parent=75 // pred_check_branch
          %1041 = sbr.rel (%p1039) target = $region80
        $region79: #{tpu_custom_call.1} parent=75 // pred_region
          %s1042 = sand.u32 %s292, 1
          %s1043 = scalar_lea.sflag [#allocation4], %s1042
          %s1044 = sand.u32 %s292, 1
          %s1045 = smul.addr %s1044, 8
          %s1046 = scalar_lea.vmem [#allocation3], %s1045
          %1048 = dma.done %s1043, 128
        $region80: #{tpu_custom_call.1} parent=75 // pred_fallthru
          _
      $region76: #{tpu_custom_call.1} parent=5 // pred_fallthru
        _
    $region6: #{tpu_custom_call.1} parent=1 // loop_footer
      %s25 = sadd.s32 1, %s21
    $region7: #{tpu_custom_call.1} parent=1 // loop_footer_branch
      %20 = sbr.rel target = $region3
    $region8: #{tpu_custom_call.1} parent=1 // loop_exit
      _
    %1049 = vsyncpa [#allocation4], 1
    %s1050 = scalar_lea.sflag [#allocation4], 1
    %1051 = vsyncpa %s1050, 1

</llo_original>
